<compile_context>
chip_gen: v7x
topology: tpu7x:2x2x1
jax: 0.10.0
libtpu: 0.0.40
codegen_flags: <defaults>
</compile_context>

<pallas_src>
import jax
import jax.numpy as jnp
import numpy as np
from jax import lax
from jax.experimental import pallas as pl
from jax.experimental.pallas import tpu as pltpu

H = 100          # hidden_layer_size
HP = 128         # padded hidden (lane aligned)
INPUT_SIZE = 1
OUTPUT_SIZE = 1
SEQ_LEN = 8

# dtype of the recurrent weight matrix (the only MXU operand).
RECURRENT_DTYPE = jnp.bfloat16


def lstm_kernel(x_ref, wih_ref, whh_ref, b_ref, wlin_ref, blin_ref, out_ref):
    hp = whh_ref.shape[0]            # 128 (padded hidden)
    seq_len = x_ref.shape[0]         # 8, static at trace time

    # Small loop-invariant operands hoisted once (8 partially-filled vregs).
    # W_hh is deliberately NOT hoisted (see header comment).
    wih = wih_ref[...]               # (1, 4*Hp) f32, 0.5 folded into i/f/o cols
    b = b_ref[...]                   # (1, 4*Hp) f32, (b_ih + b_hh) with fold

    def activations(gates):
        # One contiguous EUP tanh pass over the full gate row. The sigmoid
        # pre-scale (0.5*x) for the i/f/o gates is already folded into the
        # weights/bias, so sigmoid(x) == 0.5 * tanh_row + 0.5 on those lanes;
        # the g gate is a plain tanh. Padded lanes: gates == 0 -> i=f=o=0.5,
        # g=0, so padded lanes of c and h stay exactly 0.
        t = jnp.tanh(gates)                               # (1, 4*Hp)
        i_g = 0.5 * t[:, 0 * hp:1 * hp] + 0.5
        f_g = 0.5 * t[:, 1 * hp:2 * hp] + 0.5
        g_g = t[:, 2 * hp:3 * hp]
        o_g = 0.5 * t[:, 3 * hp:4 * hp] + 0.5
        return i_g, f_g, g_g, o_g

    # ---- peeled step 0: h0 == c0 == 0, so the recurrent matmul is exactly 0
    # and only row 0 of the input projection sits at the head of the chain.
    i_g, f_g, g_g, o_g = activations(x_ref[0] * wih + b)
    c = i_g * g_g                     # f_g * c0 == 0
    h = o_g * jnp.tanh(c)             # (1, Hp) f32

    # ---- steps 1..L-1, fully unrolled (static trip count -> static indices).
    for t_step in range(1, seq_len):
        gx = x_ref[t_step] * wih + b                      # VPU; overlaps MXU
        rec = jnp.dot(h.astype(whh_ref.dtype), whh_ref[...],
                      preferred_element_type=jnp.float32)  # (1, 4*Hp) f32 acc
        i_g, f_g, g_g, o_g = activations(gx + rec)
        c = f_g * c + i_g * g_g
        h = o_g * jnp.tanh(c)

    # Final linear layer (output_size == 1) on VPU + XLU lane reduce; keep the
    # MXU out of the epilogue, write the (1, 1) result directly.
    y = jnp.sum(h * wlin_ref[...], axis=-1, keepdims=True) + blin_ref[...]
    out_ref[...] = y                                       # (1, 1)


@jax.jit
def lstm_forward(x, wih_t_p, whh_t_p, b_p, wlin_p, blin_p):
    x1d = x.reshape(-1).astype(jnp.float32)                # (L,)

    out = pl.pallas_call(
        lstm_kernel,
        out_shape=jax.ShapeDtypeStruct((1, OUTPUT_SIZE), jnp.float32),
        # No grid: single invocation, every operand fully resident
        # (~0.15 MiB total), no double-buffering, no pipeline prologue.
        in_specs=[pl.BlockSpec(memory_space=pltpu.MemorySpace.SMEM)]       # x
                 + [pl.BlockSpec(memory_space=pltpu.MemorySpace.VMEM)] * 5,
        out_specs=pl.BlockSpec(memory_space=pltpu.MemorySpace.VMEM),
    )(x1d, wih_t_p, whh_t_p, b_p, wlin_p, blin_p)
    return out[0]   # shape (1,) == predictions[-1]


def init_params(key):
    """Deterministic init matching nn.LSTM / nn.Linear parameter shapes."""
    k = 1.0 / np.sqrt(H)
    ks = jax.random.split(key, 6)
    w_ih = jax.random.uniform(ks[0], (4 * H, INPUT_SIZE), jnp.float32, -k, k)
    w_hh = jax.random.uniform(ks[1], (4 * H, H), jnp.float32, -k, k)
    b_ih = jax.random.uniform(ks[2], (4 * H,), jnp.float32, -k, k)
    b_hh = jax.random.uniform(ks[3], (4 * H,), jnp.float32, -k, k)
    w_lin = jax.random.uniform(ks[4], (OUTPUT_SIZE, H), jnp.float32, -k, k)
    b_lin = jax.random.uniform(ks[5], (OUTPUT_SIZE,), jnp.float32, -k, k)
    return w_ih, w_hh, b_ih, b_hh, w_lin, b_lin


def pad_params(w_ih, w_hh, b_ih, b_hh, w_lin, b_lin):
    """Transpose + zero-pad hidden dim 100 -> 128, gate blocks lane-aligned.

    The sigmoid pre-scale 0.5 is folded into the i/f/o gate blocks of W_ih,
    W_hh and the combined bias (g gate and W_lin untouched), so the kernel can
    run one tanh over the whole gate row. Padded lanes MUST stay exactly zero
    in all gate columns, W_hh rows, the bias and W_lin: with zero padding the
    padded lanes of c and h are 0 at every step, so nothing leaks out.
    W_hh is stored in bf16 (MXU operand only); everything else stays f32.
    """
    gate_pre = (0.5, 0.5, 1.0, 0.5)               # PyTorch gate order: i, f, g, o
    wih_t_p = jnp.zeros((INPUT_SIZE, 4 * HP), jnp.float32)
    whh_t_p = jnp.zeros((HP, 4 * HP), jnp.float32)
    b_p = jnp.zeros((1, 4 * HP), jnp.float32)
    b_sum = b_ih + b_hh                           # fold both biases
    for g in range(4):
        s = gate_pre[g]
        wih_t_p = wih_t_p.at[:, g * HP:g * HP + H].set(s * w_ih[g * H:(g + 1) * H, :].T)
        whh_t_p = whh_t_p.at[:H, g * HP:g * HP + H].set(s * w_hh[g * H:(g + 1) * H, :].T)
        b_p = b_p.at[0, g * HP:g * HP + H].set(s * b_sum[g * H:(g + 1) * H])
    whh_t_p = whh_t_p.astype(RECURRENT_DTYPE)
    wlin_p = jnp.zeros((1, HP), jnp.float32).at[0, :H].set(w_lin[0, :])
    blin_p = b_lin.reshape(1, OUTPUT_SIZE)
    return wih_t_p, whh_t_p, b_p, wlin_p, blin_p


def reference_forward(x, w_ih, w_hh, b_ih, b_hh, w_lin, b_lin):
    """Pure-JAX (f32) reference of the PyTorch module's forward."""
    x2d = x.reshape(-1, INPUT_SIZE)

    def step(carry, x_t):
        h, c = carry
        gates = x_t @ w_ih.T + b_ih + h @ w_hh.T + b_hh
        i_g = jax.nn.sigmoid(gates[0:H])
        f_g = jax.nn.sigmoid(gates[H:2 * H])
        g_g = jnp.tanh(gates[2 * H:3 * H])
        o_g = jax.nn.sigmoid(gates[3 * H:4 * H])
        c_n = f_g * c + i_g * g_g
        h_n = o_g * jnp.tanh(c_n)
        return (h_n, c_n), h_n

    h0 = jnp.zeros((H,), jnp.float32)
    c0 = jnp.zeros((H,), jnp.float32)
    (_, _), hs = lax.scan(step, (h0, c0), x2d)
    preds = hs @ w_lin.T + b_lin
    return preds[-1]


if __name__ == "__main__":
    key = jax.random.PRNGKey(0)
    pkey, xkey = jax.random.split(key)
    params = init_params(pkey)
    padded = pad_params(*params)

    # input_seq: 1-D sequence, viewed as (L, 1, 1) inside the torch module
    input_seq = jax.random.normal(xkey, (SEQ_LEN,), jnp.float32)

    out = lstm_forward(input_seq, *padded)
    out = jax.block_until_ready(out)

    ref = reference_forward(input_seq, *params)
    # Tolerance reflects the bf16-stored recurrent weights (single-pass MXU);
    # observed error is O(1e-3) against the f32 reference. Set
    # RECURRENT_DTYPE = jnp.float32 above to recover ~1e-4 agreement.
    np.testing.assert_allclose(np.asarray(out), np.asarray(ref),
                               rtol=5e-3, atol=5e-3)
    print("KERNEL_OK")
</pallas_src>

<mosaic_0001>
module attributes {stable_mosaic.version = 11 : i64} {
  func.func @lstm_kernel(%arg0: memref<8xf32, #tpu.memory_space<smem>>, %arg1: memref<1x512xf32, #tpu.memory_space<vmem>>, %arg2: memref<128x512xbf16, #tpu.memory_space<vmem>>, %arg3: memref<1x512xf32, #tpu.memory_space<vmem>>, %arg4: memref<1x128xf32, #tpu.memory_space<vmem>>, %arg5: memref<1x1xf32, #tpu.memory_space<vmem>>, %arg6: memref<1x1xf32, #tpu.memory_space<vmem>>) attributes {dimension_semantics = [], scalar_prefetch = 0 : i64, scratch_operands = 0 : i64, tpu.core_type = #tpu.core_type<tc>} {
    %c0 = arith.constant 0 : index
    %c0_0 = arith.constant 0 : index
    %0 = vector.load %arg1[%c0, %c0_0] : memref<1x512xf32, #tpu.memory_space<vmem>>, vector<1x512xf32>
    %c0_1 = arith.constant 0 : index
    %c0_2 = arith.constant 0 : index
    %1 = vector.load %arg3[%c0_1, %c0_2] : memref<1x512xf32, #tpu.memory_space<vmem>>, vector<1x512xf32>
    %c0_3 = arith.constant 0 : index
    %2 = memref.load %arg0[%c0_3] : memref<8xf32, #tpu.memory_space<smem>>
    %3 = vector.broadcast %2 : f32 to vector<1x512xf32>
    %4 = arith.mulf %3, %0 : vector<1x512xf32>
    %5 = arith.addf %4, %1 : vector<1x512xf32>
    %6 = math.tanh %5 : vector<1x512xf32>
    %7 = vector.extract_strided_slice %6 {offsets = [0, 0], sizes = [1, 128], strides = [1, 1]} : vector<1x512xf32> to vector<1x128xf32>
    %cst = arith.constant 5.000000e-01 : f32
    %8 = vector.broadcast %cst : f32 to vector<1x128xf32>
    %9 = arith.mulf %8, %7 : vector<1x128xf32>
    %cst_4 = arith.constant 5.000000e-01 : f32
    %10 = vector.broadcast %cst_4 : f32 to vector<1x128xf32>
    %11 = arith.addf %9, %10 : vector<1x128xf32>
    %12 = vector.extract_strided_slice %6 {offsets = [0, 256], sizes = [1, 128], strides = [1, 1]} : vector<1x512xf32> to vector<1x128xf32>
    %13 = vector.extract_strided_slice %6 {offsets = [0, 384], sizes = [1, 128], strides = [1, 1]} : vector<1x512xf32> to vector<1x128xf32>
    %cst_5 = arith.constant 5.000000e-01 : f32
    %14 = vector.broadcast %cst_5 : f32 to vector<1x128xf32>
    %15 = arith.mulf %14, %13 : vector<1x128xf32>
    %cst_6 = arith.constant 5.000000e-01 : f32
    %16 = vector.broadcast %cst_6 : f32 to vector<1x128xf32>
    %17 = arith.addf %15, %16 : vector<1x128xf32>
    %18 = arith.mulf %11, %12 : vector<1x128xf32>
    %19 = math.tanh %18 : vector<1x128xf32>
    %20 = arith.mulf %17, %19 : vector<1x128xf32>
    %c1 = arith.constant 1 : index
    %21 = memref.load %arg0[%c1] : memref<8xf32, #tpu.memory_space<smem>>
    %22 = vector.broadcast %21 : f32 to vector<1x512xf32>
    %23 = arith.mulf %22, %0 : vector<1x512xf32>
    %24 = arith.addf %23, %1 : vector<1x512xf32>
    %25 = arith.truncf %20 : vector<1x128xf32> to vector<1x128xbf16>
    %c0_7 = arith.constant 0 : index
    %c0_8 = arith.constant 0 : index
    %26 = vector.load %arg2[%c0_7, %c0_8] : memref<128x512xbf16, #tpu.memory_space<vmem>>, vector<128x512xbf16>
    %cst_9 = arith.constant dense<0.000000e+00> : vector<1x512xf32>
    %27 = tpu.matmul %25, %26, %cst_9 {dimension_numbers = #tpu.dot_dimension_numbers<[1], [0], [0], [1], [0, 0, 1, 1], [], []>} : vector<1x128xbf16>, vector<128x512xbf16>, vector<1x512xf32> -> vector<1x512xf32>
    %28 = arith.addf %24, %27 : vector<1x512xf32>
    %29 = math.tanh %28 : vector<1x512xf32>
    %30 = vector.extract_strided_slice %29 {offsets = [0, 0], sizes = [1, 128], strides = [1, 1]} : vector<1x512xf32> to vector<1x128xf32>
    %cst_10 = arith.constant 5.000000e-01 : f32
    %31 = vector.broadcast %cst_10 : f32 to vector<1x128xf32>
    %32 = arith.mulf %31, %30 : vector<1x128xf32>
    %cst_11 = arith.constant 5.000000e-01 : f32
    %33 = vector.broadcast %cst_11 : f32 to vector<1x128xf32>
    %34 = arith.addf %32, %33 : vector<1x128xf32>
    %35 = vector.extract_strided_slice %29 {offsets = [0, 128], sizes = [1, 128], strides = [1, 1]} : vector<1x512xf32> to vector<1x128xf32>
    %cst_12 = arith.constant 5.000000e-01 : f32
    %36 = vector.broadcast %cst_12 : f32 to vector<1x128xf32>
    %37 = arith.mulf %36, %35 : vector<1x128xf32>
    %cst_13 = arith.constant 5.000000e-01 : f32
    %38 = vector.broadcast %cst_13 : f32 to vector<1x128xf32>
    %39 = arith.addf %37, %38 : vector<1x128xf32>
    %40 = vector.extract_strided_slice %29 {offsets = [0, 256], sizes = [1, 128], strides = [1, 1]} : vector<1x512xf32> to vector<1x128xf32>
    %41 = vector.extract_strided_slice %29 {offsets = [0, 384], sizes = [1, 128], strides = [1, 1]} : vector<1x512xf32> to vector<1x128xf32>
    %cst_14 = arith.constant 5.000000e-01 : f32
    %42 = vector.broadcast %cst_14 : f32 to vector<1x128xf32>
    %43 = arith.mulf %42, %41 : vector<1x128xf32>
    %cst_15 = arith.constant 5.000000e-01 : f32
    %44 = vector.broadcast %cst_15 : f32 to vector<1x128xf32>
    %45 = arith.addf %43, %44 : vector<1x128xf32>
    %46 = arith.mulf %39, %18 : vector<1x128xf32>
    %47 = arith.mulf %34, %40 : vector<1x128xf32>
    %48 = arith.addf %46, %47 : vector<1x128xf32>
    %49 = math.tanh %48 : vector<1x128xf32>
    %50 = arith.mulf %45, %49 : vector<1x128xf32>
    %c2 = arith.constant 2 : index
    %51 = memref.load %arg0[%c2] : memref<8xf32, #tpu.memory_space<smem>>
    %52 = vector.broadcast %51 : f32 to vector<1x512xf32>
    %53 = arith.mulf %52, %0 : vector<1x512xf32>
    %54 = arith.addf %53, %1 : vector<1x512xf32>
    %55 = arith.truncf %50 : vector<1x128xf32> to vector<1x128xbf16>
    %c0_16 = arith.constant 0 : index
    %c0_17 = arith.constant 0 : index
    %56 = vector.load %arg2[%c0_16, %c0_17] : memref<128x512xbf16, #tpu.memory_space<vmem>>, vector<128x512xbf16>
    %cst_18 = arith.constant dense<0.000000e+00> : vector<1x512xf32>
    %57 = tpu.matmul %55, %56, %cst_18 {dimension_numbers = #tpu.dot_dimension_numbers<[1], [0], [0], [1], [0, 0, 1, 1], [], []>} : vector<1x128xbf16>, vector<128x512xbf16>, vector<1x512xf32> -> vector<1x512xf32>
    %58 = arith.addf %54, %57 : vector<1x512xf32>
    %59 = math.tanh %58 : vector<1x512xf32>
    %60 = vector.extract_strided_slice %59 {offsets = [0, 0], sizes = [1, 128], strides = [1, 1]} : vector<1x512xf32> to vector<1x128xf32>
    %cst_19 = arith.constant 5.000000e-01 : f32
    %61 = vector.broadcast %cst_19 : f32 to vector<1x128xf32>
    %62 = arith.mulf %61, %60 : vector<1x128xf32>
    %cst_20 = arith.constant 5.000000e-01 : f32
    %63 = vector.broadcast %cst_20 : f32 to vector<1x128xf32>
    %64 = arith.addf %62, %63 : vector<1x128xf32>
    %65 = vector.extract_strided_slice %59 {offsets = [0, 128], sizes = [1, 128], strides = [1, 1]} : vector<1x512xf32> to vector<1x128xf32>
    %cst_21 = arith.constant 5.000000e-01 : f32
    %66 = vector.broadcast %cst_21 : f32 to vector<1x128xf32>
    %67 = arith.mulf %66, %65 : vector<1x128xf32>
    %cst_22 = arith.constant 5.000000e-01 : f32
    %68 = vector.broadcast %cst_22 : f32 to vector<1x128xf32>
    %69 = arith.addf %67, %68 : vector<1x128xf32>
    %70 = vector.extract_strided_slice %59 {offsets = [0, 256], sizes = [1, 128], strides = [1, 1]} : vector<1x512xf32> to vector<1x128xf32>
    %71 = vector.extract_strided_slice %59 {offsets = [0, 384], sizes = [1, 128], strides = [1, 1]} : vector<1x512xf32> to vector<1x128xf32>
    %cst_23 = arith.constant 5.000000e-01 : f32
    %72 = vector.broadcast %cst_23 : f32 to vector<1x128xf32>
    %73 = arith.mulf %72, %71 : vector<1x128xf32>
    %cst_24 = arith.constant 5.000000e-01 : f32
    %74 = vector.broadcast %cst_24 : f32 to vector<1x128xf32>
    %75 = arith.addf %73, %74 : vector<1x128xf32>
    %76 = arith.mulf %69, %48 : vector<1x128xf32>
    %77 = arith.mulf %64, %70 : vector<1x128xf32>
    %78 = arith.addf %76, %77 : vector<1x128xf32>
    %79 = math.tanh %78 : vector<1x128xf32>
    %80 = arith.mulf %75, %79 : vector<1x128xf32>
    %c3 = arith.constant 3 : index
    %81 = memref.load %arg0[%c3] : memref<8xf32, #tpu.memory_space<smem>>
    %82 = vector.broadcast %81 : f32 to vector<1x512xf32>
    %83 = arith.mulf %82, %0 : vector<1x512xf32>
    %84 = arith.addf %83, %1 : vector<1x512xf32>
    %85 = arith.truncf %80 : vector<1x128xf32> to vector<1x128xbf16>
    %c0_25 = arith.constant 0 : index
    %c0_26 = arith.constant 0 : index
    %86 = vector.load %arg2[%c0_25, %c0_26] : memref<128x512xbf16, #tpu.memory_space<vmem>>, vector<128x512xbf16>
    %cst_27 = arith.constant dense<0.000000e+00> : vector<1x512xf32>
    %87 = tpu.matmul %85, %86, %cst_27 {dimension_numbers = #tpu.dot_dimension_numbers<[1], [0], [0], [1], [0, 0, 1, 1], [], []>} : vector<1x128xbf16>, vector<128x512xbf16>, vector<1x512xf32> -> vector<1x512xf32>
    %88 = arith.addf %84, %87 : vector<1x512xf32>
    %89 = math.tanh %88 : vector<1x512xf32>
    %90 = vector.extract_strided_slice %89 {offsets = [0, 0], sizes = [1, 128], strides = [1, 1]} : vector<1x512xf32> to vector<1x128xf32>
    %cst_28 = arith.constant 5.000000e-01 : f32
    %91 = vector.broadcast %cst_28 : f32 to vector<1x128xf32>
    %92 = arith.mulf %91, %90 : vector<1x128xf32>
    %cst_29 = arith.constant 5.000000e-01 : f32
    %93 = vector.broadcast %cst_29 : f32 to vector<1x128xf32>
    %94 = arith.addf %92, %93 : vector<1x128xf32>
    %95 = vector.extract_strided_slice %89 {offsets = [0, 128], sizes = [1, 128], strides = [1, 1]} : vector<1x512xf32> to vector<1x128xf32>
    %cst_30 = arith.constant 5.000000e-01 : f32
    %96 = vector.broadcast %cst_30 : f32 to vector<1x128xf32>
    %97 = arith.mulf %96, %95 : vector<1x128xf32>
    %cst_31 = arith.constant 5.000000e-01 : f32
    %98 = vector.broadcast %cst_31 : f32 to vector<1x128xf32>
    %99 = arith.addf %97, %98 : vector<1x128xf32>
    %100 = vector.extract_strided_slice %89 {offsets = [0, 256], sizes = [1, 128], strides = [1, 1]} : vector<1x512xf32> to vector<1x128xf32>
    %101 = vector.extract_strided_slice %89 {offsets = [0, 384], sizes = [1, 128], strides = [1, 1]} : vector<1x512xf32> to vector<1x128xf32>
    %cst_32 = arith.constant 5.000000e-01 : f32
    %102 = vector.broadcast %cst_32 : f32 to vector<1x128xf32>
    %103 = arith.mulf %102, %101 : vector<1x128xf32>
    %cst_33 = arith.constant 5.000000e-01 : f32
    %104 = vector.broadcast %cst_33 : f32 to vector<1x128xf32>
    %105 = arith.addf %103, %104 : vector<1x128xf32>
    %106 = arith.mulf %99, %78 : vector<1x128xf32>
    %107 = arith.mulf %94, %100 : vector<1x128xf32>
    %108 = arith.addf %106, %107 : vector<1x128xf32>
    %109 = math.tanh %108 : vector<1x128xf32>
    %110 = arith.mulf %105, %109 : vector<1x128xf32>
    %c4 = arith.constant 4 : index
    %111 = memref.load %arg0[%c4] : memref<8xf32, #tpu.memory_space<smem>>
    %112 = vector.broadcast %111 : f32 to vector<1x512xf32>
    %113 = arith.mulf %112, %0 : vector<1x512xf32>
    %114 = arith.addf %113, %1 : vector<1x512xf32>
    %115 = arith.truncf %110 : vector<1x128xf32> to vector<1x128xbf16>
    %c0_34 = arith.constant 0 : index
    %c0_35 = arith.constant 0 : index
    %116 = vector.load %arg2[%c0_34, %c0_35] : memref<128x512xbf16, #tpu.memory_space<vmem>>, vector<128x512xbf16>
    %cst_36 = arith.constant dense<0.000000e+00> : vector<1x512xf32>
    %117 = tpu.matmul %115, %116, %cst_36 {dimension_numbers = #tpu.dot_dimension_numbers<[1], [0], [0], [1], [0, 0, 1, 1], [], []>} : vector<1x128xbf16>, vector<128x512xbf16>, vector<1x512xf32> -> vector<1x512xf32>
    %118 = arith.addf %114, %117 : vector<1x512xf32>
    %119 = math.tanh %118 : vector<1x512xf32>
    %120 = vector.extract_strided_slice %119 {offsets = [0, 0], sizes = [1, 128], strides = [1, 1]} : vector<1x512xf32> to vector<1x128xf32>
    %cst_37 = arith.constant 5.000000e-01 : f32
    %121 = vector.broadcast %cst_37 : f32 to vector<1x128xf32>
    %122 = arith.mulf %121, %120 : vector<1x128xf32>
    %cst_38 = arith.constant 5.000000e-01 : f32
    %123 = vector.broadcast %cst_38 : f32 to vector<1x128xf32>
    %124 = arith.addf %122, %123 : vector<1x128xf32>
    %125 = vector.extract_strided_slice %119 {offsets = [0, 128], sizes = [1, 128], strides = [1, 1]} : vector<1x512xf32> to vector<1x128xf32>
    %cst_39 = arith.constant 5.000000e-01 : f32
    %126 = vector.broadcast %cst_39 : f32 to vector<1x128xf32>
    %127 = arith.mulf %126, %125 : vector<1x128xf32>
    %cst_40 = arith.constant 5.000000e-01 : f32
    %128 = vector.broadcast %cst_40 : f32 to vector<1x128xf32>
    %129 = arith.addf %127, %128 : vector<1x128xf32>
    %130 = vector.extract_strided_slice %119 {offsets = [0, 256], sizes = [1, 128], strides = [1, 1]} : vector<1x512xf32> to vector<1x128xf32>
    %131 = vector.extract_strided_slice %119 {offsets = [0, 384], sizes = [1, 128], strides = [1, 1]} : vector<1x512xf32> to vector<1x128xf32>
    %cst_41 = arith.constant 5.000000e-01 : f32
    %132 = vector.broadcast %cst_41 : f32 to vector<1x128xf32>
    %133 = arith.mulf %132, %131 : vector<1x128xf32>
    %cst_42 = arith.constant 5.000000e-01 : f32
    %134 = vector.broadcast %cst_42 : f32 to vector<1x128xf32>
    %135 = arith.addf %133, %134 : vector<1x128xf32>
    %136 = arith.mulf %129, %108 : vector<1x128xf32>
    %137 = arith.mulf %124, %130 : vector<1x128xf32>
    %138 = arith.addf %136, %137 : vector<1x128xf32>
    %139 = math.tanh %138 : vector<1x128xf32>
    %140 = arith.mulf %135, %139 : vector<1x128xf32>
    %c5 = arith.constant 5 : index
    %141 = memref.load %arg0[%c5] : memref<8xf32, #tpu.memory_space<smem>>
    %142 = vector.broadcast %141 : f32 to vector<1x512xf32>
    %143 = arith.mulf %142, %0 : vector<1x512xf32>
    %144 = arith.addf %143, %1 : vector<1x512xf32>
    %145 = arith.truncf %140 : vector<1x128xf32> to vector<1x128xbf16>
    %c0_43 = arith.constant 0 : index
    %c0_44 = arith.constant 0 : index
    %146 = vector.load %arg2[%c0_43, %c0_44] : memref<128x512xbf16, #tpu.memory_space<vmem>>, vector<128x512xbf16>
    %cst_45 = arith.constant dense<0.000000e+00> : vector<1x512xf32>
    %147 = tpu.matmul %145, %146, %cst_45 {dimension_numbers = #tpu.dot_dimension_numbers<[1], [0], [0], [1], [0, 0, 1, 1], [], []>} : vector<1x128xbf16>, vector<128x512xbf16>, vector<1x512xf32> -> vector<1x512xf32>
    %148 = arith.addf %144, %147 : vector<1x512xf32>
    %149 = math.tanh %148 : vector<1x512xf32>
    %150 = vector.extract_strided_slice %149 {offsets = [0, 0], sizes = [1, 128], strides = [1, 1]} : vector<1x512xf32> to vector<1x128xf32>
    %cst_46 = arith.constant 5.000000e-01 : f32
    %151 = vector.broadcast %cst_46 : f32 to vector<1x128xf32>
    %152 = arith.mulf %151, %150 : vector<1x128xf32>
    %cst_47 = arith.constant 5.000000e-01 : f32
    %153 = vector.broadcast %cst_47 : f32 to vector<1x128xf32>
    %154 = arith.addf %152, %153 : vector<1x128xf32>
    %155 = vector.extract_strided_slice %149 {offsets = [0, 128], sizes = [1, 128], strides = [1, 1]} : vector<1x512xf32> to vector<1x128xf32>
    %cst_48 = arith.constant 5.000000e-01 : f32
    %156 = vector.broadcast %cst_48 : f32 to vector<1x128xf32>
    %157 = arith.mulf %156, %155 : vector<1x128xf32>
    %cst_49 = arith.constant 5.000000e-01 : f32
    %158 = vector.broadcast %cst_49 : f32 to vector<1x128xf32>
    %159 = arith.addf %157, %158 : vector<1x128xf32>
    %160 = vector.extract_strided_slice %149 {offsets = [0, 256], sizes = [1, 128], strides = [1, 1]} : vector<1x512xf32> to vector<1x128xf32>
    %161 = vector.extract_strided_slice %149 {offsets = [0, 384], sizes = [1, 128], strides = [1, 1]} : vector<1x512xf32> to vector<1x128xf32>
    %cst_50 = arith.constant 5.000000e-01 : f32
    %162 = vector.broadcast %cst_50 : f32 to vector<1x128xf32>
    %163 = arith.mulf %162, %161 : vector<1x128xf32>
    %cst_51 = arith.constant 5.000000e-01 : f32
    %164 = vector.broadcast %cst_51 : f32 to vector<1x128xf32>
    %165 = arith.addf %163, %164 : vector<1x128xf32>
    %166 = arith.mulf %159, %138 : vector<1x128xf32>
    %167 = arith.mulf %154, %160 : vector<1x128xf32>
    %168 = arith.addf %166, %167 : vector<1x128xf32>
    %169 = math.tanh %168 : vector<1x128xf32>
    %170 = arith.mulf %165, %169 : vector<1x128xf32>
    %c6 = arith.constant 6 : index
    %171 = memref.load %arg0[%c6] : memref<8xf32, #tpu.memory_space<smem>>
    %172 = vector.broadcast %171 : f32 to vector<1x512xf32>
    %173 = arith.mulf %172, %0 : vector<1x512xf32>
    %174 = arith.addf %173, %1 : vector<1x512xf32>
    %175 = arith.truncf %170 : vector<1x128xf32> to vector<1x128xbf16>
    %c0_52 = arith.constant 0 : index
    %c0_53 = arith.constant 0 : index
    %176 = vector.load %arg2[%c0_52, %c0_53] : memref<128x512xbf16, #tpu.memory_space<vmem>>, vector<128x512xbf16>
    %cst_54 = arith.constant dense<0.000000e+00> : vector<1x512xf32>
    %177 = tpu.matmul %175, %176, %cst_54 {dimension_numbers = #tpu.dot_dimension_numbers<[1], [0], [0], [1], [0, 0, 1, 1], [], []>} : vector<1x128xbf16>, vector<128x512xbf16>, vector<1x512xf32> -> vector<1x512xf32>
    %178 = arith.addf %174, %177 : vector<1x512xf32>
    %179 = math.tanh %178 : vector<1x512xf32>
    %180 = vector.extract_strided_slice %179 {offsets = [0, 0], sizes = [1, 128], strides = [1, 1]} : vector<1x512xf32> to vector<1x128xf32>
    %cst_55 = arith.constant 5.000000e-01 : f32
    %181 = vector.broadcast %cst_55 : f32 to vector<1x128xf32>
    %182 = arith.mulf %181, %180 : vector<1x128xf32>
    %cst_56 = arith.constant 5.000000e-01 : f32
    %183 = vector.broadcast %cst_56 : f32 to vector<1x128xf32>
    %184 = arith.addf %182, %183 : vector<1x128xf32>
    %185 = vector.extract_strided_slice %179 {offsets = [0, 128], sizes = [1, 128], strides = [1, 1]} : vector<1x512xf32> to vector<1x128xf32>
    %cst_57 = arith.constant 5.000000e-01 : f32
    %186 = vector.broadcast %cst_57 : f32 to vector<1x128xf32>
    %187 = arith.mulf %186, %185 : vector<1x128xf32>
    %cst_58 = arith.constant 5.000000e-01 : f32
    %188 = vector.broadcast %cst_58 : f32 to vector<1x128xf32>
    %189 = arith.addf %187, %188 : vector<1x128xf32>
    %190 = vector.extract_strided_slice %179 {offsets = [0, 256], sizes = [1, 128], strides = [1, 1]} : vector<1x512xf32> to vector<1x128xf32>
    %191 = vector.extract_strided_slice %179 {offsets = [0, 384], sizes = [1, 128], strides = [1, 1]} : vector<1x512xf32> to vector<1x128xf32>
    %cst_59 = arith.constant 5.000000e-01 : f32
    %192 = vector.broadcast %cst_59 : f32 to vector<1x128xf32>
    %193 = arith.mulf %192, %191 : vector<1x128xf32>
    %cst_60 = arith.constant 5.000000e-01 : f32
    %194 = vector.broadcast %cst_60 : f32 to vector<1x128xf32>
    %195 = arith.addf %193, %194 : vector<1x128xf32>
    %196 = arith.mulf %189, %168 : vector<1x128xf32>
    %197 = arith.mulf %184, %190 : vector<1x128xf32>
    %198 = arith.addf %196, %197 : vector<1x128xf32>
    %199 = math.tanh %198 : vector<1x128xf32>
    %200 = arith.mulf %195, %199 : vector<1x128xf32>
    %c7 = arith.constant 7 : index
    %201 = memref.load %arg0[%c7] : memref<8xf32, #tpu.memory_space<smem>>
    %202 = vector.broadcast %201 : f32 to vector<1x512xf32>
    %203 = arith.mulf %202, %0 : vector<1x512xf32>
    %204 = arith.addf %203, %1 : vector<1x512xf32>
    %205 = arith.truncf %200 : vector<1x128xf32> to vector<1x128xbf16>
    %c0_61 = arith.constant 0 : index
    %c0_62 = arith.constant 0 : index
    %206 = vector.load %arg2[%c0_61, %c0_62] : memref<128x512xbf16, #tpu.memory_space<vmem>>, vector<128x512xbf16>
    %cst_63 = arith.constant dense<0.000000e+00> : vector<1x512xf32>
    %207 = tpu.matmul %205, %206, %cst_63 {dimension_numbers = #tpu.dot_dimension_numbers<[1], [0], [0], [1], [0, 0, 1, 1], [], []>} : vector<1x128xbf16>, vector<128x512xbf16>, vector<1x512xf32> -> vector<1x512xf32>
    %208 = arith.addf %204, %207 : vector<1x512xf32>
    %209 = math.tanh %208 : vector<1x512xf32>
    %210 = vector.extract_strided_slice %209 {offsets = [0, 0], sizes = [1, 128], strides = [1, 1]} : vector<1x512xf32> to vector<1x128xf32>
    %cst_64 = arith.constant 5.000000e-01 : f32
    %211 = vector.broadcast %cst_64 : f32 to vector<1x128xf32>
    %212 = arith.mulf %211, %210 : vector<1x128xf32>
    %cst_65 = arith.constant 5.000000e-01 : f32
    %213 = vector.broadcast %cst_65 : f32 to vector<1x128xf32>
    %214 = arith.addf %212, %213 : vector<1x128xf32>
    %215 = vector.extract_strided_slice %209 {offsets = [0, 128], sizes = [1, 128], strides = [1, 1]} : vector<1x512xf32> to vector<1x128xf32>
    %cst_66 = arith.constant 5.000000e-01 : f32
    %216 = vector.broadcast %cst_66 : f32 to vector<1x128xf32>
    %217 = arith.mulf %216, %215 : vector<1x128xf32>
    %cst_67 = arith.constant 5.000000e-01 : f32
    %218 = vector.broadcast %cst_67 : f32 to vector<1x128xf32>
    %219 = arith.addf %217, %218 : vector<1x128xf32>
    %220 = vector.extract_strided_slice %209 {offsets = [0, 256], sizes = [1, 128], strides = [1, 1]} : vector<1x512xf32> to vector<1x128xf32>
    %221 = vector.extract_strided_slice %209 {offsets = [0, 384], sizes = [1, 128], strides = [1, 1]} : vector<1x512xf32> to vector<1x128xf32>
    %cst_68 = arith.constant 5.000000e-01 : f32
    %222 = vector.broadcast %cst_68 : f32 to vector<1x128xf32>
    %223 = arith.mulf %222, %221 : vector<1x128xf32>
    %cst_69 = arith.constant 5.000000e-01 : f32
    %224 = vector.broadcast %cst_69 : f32 to vector<1x128xf32>
    %225 = arith.addf %223, %224 : vector<1x128xf32>
    %226 = arith.mulf %219, %198 : vector<1x128xf32>
    %227 = arith.mulf %214, %220 : vector<1x128xf32>
    %228 = arith.addf %226, %227 : vector<1x128xf32>
    %229 = math.tanh %228 : vector<1x128xf32>
    %230 = arith.mulf %225, %229 : vector<1x128xf32>
    %c0_70 = arith.constant 0 : index
    %c0_71 = arith.constant 0 : index
    %231 = vector.load %arg4[%c0_70, %c0_71] : memref<1x128xf32, #tpu.memory_space<vmem>>, vector<1x128xf32>
    %232 = arith.mulf %230, %231 : vector<1x128xf32>
    %cst_72 = arith.constant dense<0.000000e+00> : vector<1xf32>
    %233 = vector.multi_reduction <add>, %232, %cst_72 [1] : vector<1x128xf32> to vector<1xf32>
    %234 = vector.shape_cast %233 : vector<1xf32> to vector<1x1xf32>
    %c0_73 = arith.constant 0 : index
    %c0_74 = arith.constant 0 : index
    %235 = vector.load %arg5[%c0_73, %c0_74] : memref<1x1xf32, #tpu.memory_space<vmem>>, vector<1x1xf32>
    %236 = arith.addf %234, %235 : vector<1x1xf32>
    %c0_75 = arith.constant 0 : index
    %c0_76 = arith.constant 0 : index
    %237 = vector.load %arg6[%c0_75, %c0_76] : memref<1x1xf32, #tpu.memory_space<vmem>>, vector<1x1xf32>
    tpu.vector_store %arg6[%c0_75, %c0_76], %236 {strides = array<i32>} : memref<1x1xf32, #tpu.memory_space<vmem>>, vector<1x1xf32>,
    return
  }
}

</mosaic_0001>

<llo_original>
// kernel: lstm_forward.1
$region0: #{lstm_forward.1}
  #allocation0 [shape = 'u32[]', space=smem, size = 0x4, offset = 0x4, fixed_abs, tag = 'smem constant byte address 0x4 - core index']
  #allocation1 [shape = 'u32[144,128]{1,0:T(1,128)}', space=vmem, size = 0x12000, scoped, tag = 'internal scratch']
  #allocation2 [shape = 'f32[1,1]{1,0:T(1,128)S(1)}', space=vmem, size = 0x200, scoped, tag = 'scoped memory for lstm_forward.1']
  %s0 = inlined_call_operand.vmem [shape: f32[8], index: 0, kind: input, shape index: {}]
  %s1 = inlined_call_operand.vmem [shape: f32[1,512], index: 1, kind: input, shape index: {}]
  %s2 = inlined_call_operand.hbm [shape: bf16[128,512], index: 2, kind: input, shape index: {}]
  %s3 = inlined_call_operand.vmem [shape: f32[1,512], index: 3, kind: input, shape index: {}]
  %s4 = inlined_call_operand.vmem [shape: f32[1,128], index: 4, kind: input, shape index: {}]
  %s5 = inlined_call_operand.<no memory space> [shape: f32[1,1], index: 5, kind: input, shape index: {}]
  %s6 = inlined_call_operand.hbm [shape: f32[1,1], index: 6, kind: output, shape index: {}]
  %s7 = sld [smem:[#allocation0]]
  $region42: #{lstm_forward.1} parent=0
    _
  %s9 = ssub.s32 1, %s7
  %s10 = scalar_select 0, %s9, %s7
  %v11 = vstv %s5
  %12 = vst [vmem:[#allocation2] sm:$0x1] %v11
  $region1: #{lstm_forward.1} parent=0
    #allocation3 [shape = 'u8[512]{0}', space=smem, size = 0x200, scoped, tag = 'input window, operand 0, single buffered']
    #allocation4 [shape = 's32[1]{0}', space=sflag, size = 0x4, scoped, tag = 'scoped memory for lstm_forward.1']
    #allocation5 [shape = 's32[1]{0}', space=sflag, size = 0x4, scoped, tag = 'scoped memory for lstm_forward.1']
    #allocation6 [shape = 's32[1]{0}', space=sflag, size = 0x4, scoped, tag = 'scoped memory for lstm_forward.1']
    #allocation7 [shape = 'u8[131072]{0}', space=vmem, size = 0x20000, scoped, tag = 'input window, operand 2, single buffered']
    #allocation8 [shape = 'u8[512]{0}', space=vmem, size = 0x400, scoped, tag = 'output window, operand 0, single buffered']
    %13 = vsyncpa [#allocation6], 0
    %14 = vsyncpa [#allocation4], 0
    %15 = vsyncpa [#allocation5], 0
    // Predicated region
    $region2: #{lstm_forward.1} parent=1 // pred_check
      _
    $region3: #{lstm_forward.1} parent=1 // pred_check_branch
      %17 = sbr.rel (0) target = $region5
    $region4: #{lstm_forward.1} parent=1 // pred_region
      %s19 = ssub.s32 16, 16
      %20 = vsyncadd [#allocation6], %s19
      %s22 = sshll.u32 %s0, 4
      %s23 = int_to_ptr.vmem [resolvable:$true] %s22
      %25 = dma.vmem_to_smem %s23, 16, [#allocation3], [#allocation6]
    $region5: #{lstm_forward.1} parent=1 // pred_fallthru
      _
    // Predicated region
    $region6: #{lstm_forward.1} parent=1 // pred_check
      _
    $region7: #{lstm_forward.1} parent=1 // pred_check_branch
      %27 = sbr.rel (0) target = $region9
    $region8: #{lstm_forward.1} parent=1 // pred_region
      _
    $region9: #{lstm_forward.1} parent=1 // pred_fallthru
      _
    // Predicated region
    $region10: #{lstm_forward.1} parent=1 // pred_check
      _
    $region11: #{lstm_forward.1} parent=1 // pred_check_branch
      %29 = sbr.rel (0) target = $region13
    $region12: #{lstm_forward.1} parent=1 // pred_region
      %s31 = ssub.s32 4096, 4096
      %32 = vsyncadd [#allocation4], %s31
      %s33 = sshll.u32 [#allocation7], 4
      %s34 = int_to_ptr.vmem [resolvable:$true] %s33
      %39 = dma.hbm_to_vmem [thread:$0]  %s2, 4096, %s34, [#allocation4], 256, 256, 16
    $region13: #{lstm_forward.1} parent=1 // pred_fallthru
      _
    // Predicated region
    $region14: #{lstm_forward.1} parent=1 // pred_check
      _
    $region15: #{lstm_forward.1} parent=1 // pred_check_branch
      %41 = sbr.rel (0) target = $region17
    $region16: #{lstm_forward.1} parent=1 // pred_region
      _
    $region17: #{lstm_forward.1} parent=1 // pred_fallthru
      _
    // Predicated region
    $region18: #{lstm_forward.1} parent=1 // pred_check
      _
    $region19: #{lstm_forward.1} parent=1 // pred_check_branch
      %43 = sbr.rel (0) target = $region21
    $region20: #{lstm_forward.1} parent=1 // pred_region
      _
    $region21: #{lstm_forward.1} parent=1 // pred_fallthru
      _
    // Predicated region
    $region22: #{lstm_forward.1} parent=1 // pred_check
      _
    $region23: #{lstm_forward.1} parent=1 // pred_check_branch
      %45 = sbr.rel (0) target = $region25
    $region24: #{lstm_forward.1} parent=1 // pred_region
      _
    $region25: #{lstm_forward.1} parent=1 // pred_fallthru
      _
    // Predicated region
    $region26: #{lstm_forward.1} parent=1 // pred_check
      _
    $region27: #{lstm_forward.1} parent=1 // pred_check_branch
      %47 = sbr.rel (0) target = $region29
    $region28: #{lstm_forward.1} parent=1 // pred_region
      %48 = dma.done [#allocation6], 16
    $region29: #{lstm_forward.1} parent=1 // pred_fallthru
      _
    // Predicated region
    $region30: #{lstm_forward.1} parent=1 // pred_check
      _
    $region31: #{lstm_forward.1} parent=1 // pred_check_branch
      %50 = sbr.rel (0) target = $region33
    $region32: #{lstm_forward.1} parent=1 // pred_region
      %51 = dma.done [#allocation4], 4096
    $region33: #{lstm_forward.1} parent=1 // pred_fallthru
      _
    %52 = sfence
    %v54 = vld [vmem:[%s1] sm:$0xf]
    %v55 = vld [vmem:[%s3] sm:$0xf]
    %s56 = sld [smem:[#allocation3]]
    %v57 = vstv %s56
    %v58 = vmul.f32 %v57, %v54
    %v59 = vadd.f32 %v58, %v55
    %v60 = vtanh.pop %v59
    %v61 = vmul.f32 %v60, 0.5
    %v62 = vadd.f32 %v61, 0.5
    %v64 = vrot.slane %v60, 3
    %v66 = vmul.f32 %v64, 0.5
    %v67 = vadd.f32 %v66, 0.5
    %v68 = vrot.slane %v60, 2
    %v70 = vmul.f32 %v62, %v68
    %v71 = vtanh.pop %v70
    %v72 = vmul.f32 %v67, %v71
    %s73 = sld [smem:[#allocation3 + $0x1]]
    %v74 = vstv %s73
    %v75 = vmul.f32 %v74, %v54
    %v76 = vadd.f32 %v75, %v55
    %v77 = vpack.c.bf16 %v72, %v72
    %v78 = vld [vmem:[#allocation7] sm:$0xff]
    %v79 = vld [vmem:[#allocation7 + $0x8] sm:$0xff]
    %v80 = vld [vmem:[#allocation7 + $0x10] sm:$0xff]
    %v81 = vld [vmem:[#allocation7 + $0x18] sm:$0xff]
    %v82 = vld [vmem:[#allocation7 + $0x20] sm:$0xff]
    %v83 = vld [vmem:[#allocation7 + $0x28] sm:$0xff]
    %v84 = vld [vmem:[#allocation7 + $0x30] sm:$0xff]
    %v85 = vld [vmem:[#allocation7 + $0x38] sm:$0xff]
    %v86 = vld [vmem:[#allocation7 + $0x40] sm:$0xff]
    %v87 = vld [vmem:[#allocation7 + $0x48] sm:$0xff]
    %v88 = vld [vmem:[#allocation7 + $0x50] sm:$0xff]
    %v89 = vld [vmem:[#allocation7 + $0x58] sm:$0xff]
    %v90 = vld [vmem:[#allocation7 + $0x60] sm:$0xff]
    %v91 = vld [vmem:[#allocation7 + $0x68] sm:$0xff]
    %v92 = vld [vmem:[#allocation7 + $0x70] sm:$0xff]
    %v93 = vld [vmem:[#allocation7 + $0x78] sm:$0xff]
    %v94 = vld [vmem:[#allocation7 + $0x80] sm:$0xff]
    %v95 = vld [vmem:[#allocation7 + $0x88] sm:$0xff]
    %v96 = vld [vmem:[#allocation7 + $0x90] sm:$0xff]
    %v97 = vld [vmem:[#allocation7 + $0x98] sm:$0xff]
    %v98 = vld [vmem:[#allocation7 + $0xa0] sm:$0xff]
    %v99 = vld [vmem:[#allocation7 + $0xa8] sm:$0xff]
    %v100 = vld [vmem:[#allocation7 + $0xb0] sm:$0xff]
    %v101 = vld [vmem:[#allocation7 + $0xb8] sm:$0xff]
    %v102 = vld [vmem:[#allocation7 + $0xc0] sm:$0xff]
    %v103 = vld [vmem:[#allocation7 + $0xc8] sm:$0xff]
    %v104 = vld [vmem:[#allocation7 + $0xd0] sm:$0xff]
    %v105 = vld [vmem:[#allocation7 + $0xd8] sm:$0xff]
    %v106 = vld [vmem:[#allocation7 + $0xe0] sm:$0xff]
    %v107 = vld [vmem:[#allocation7 + $0xe8] sm:$0xff]
    %v108 = vld [vmem:[#allocation7 + $0xf0] sm:$0xff]
    %v109 = vld [vmem:[#allocation7 + $0xf8] sm:$0xff]
    %v142 = vunpack.c.l.b16 %v78
    %v143 = vunpack.c.h.b16 %v78
    %v144 = vunpack.c.l.b16 %v79
    %v145 = vunpack.c.h.b16 %v79
    %v146 = vunpack.c.l.b16 %v80
    %v147 = vunpack.c.h.b16 %v80
    %v148 = vunpack.c.l.b16 %v81
    %v149 = vunpack.c.h.b16 %v81
    %v150 = vunpack.c.l.b16 %v82
    %v151 = vunpack.c.h.b16 %v82
    %v152 = vunpack.c.l.b16 %v83
    %v153 = vunpack.c.h.b16 %v83
    %v154 = vunpack.c.l.b16 %v84
    %v155 = vunpack.c.h.b16 %v84
    %v156 = vunpack.c.l.b16 %v85
    %v157 = vunpack.c.h.b16 %v85
    %v158 = vunpack.c.l.b16 %v86
    %v159 = vunpack.c.h.b16 %v86
    %v160 = vunpack.c.l.b16 %v87
    %v161 = vunpack.c.h.b16 %v87
    %v162 = vunpack.c.l.b16 %v88
    %v163 = vunpack.c.h.b16 %v88
    %v164 = vunpack.c.l.b16 %v89
    %v165 = vunpack.c.h.b16 %v89
    %v166 = vunpack.c.l.b16 %v90
    %v167 = vunpack.c.h.b16 %v90
    %v168 = vunpack.c.l.b16 %v91
    %v169 = vunpack.c.h.b16 %v91
    %v170 = vunpack.c.l.b16 %v92
    %v171 = vunpack.c.h.b16 %v92
    %v172 = vunpack.c.l.b16 %v93
    %v173 = vunpack.c.h.b16 %v93
    %v174 = vunpack.c.l.b16 %v94
    %v175 = vunpack.c.h.b16 %v94
    %v176 = vunpack.c.l.b16 %v95
    %v177 = vunpack.c.h.b16 %v95
    %v178 = vunpack.c.l.b16 %v96
    %v179 = vunpack.c.h.b16 %v96
    %v180 = vunpack.c.l.b16 %v97
    %v181 = vunpack.c.h.b16 %v97
    %v182 = vunpack.c.l.b16 %v98
    %v183 = vunpack.c.h.b16 %v98
    %v184 = vunpack.c.l.b16 %v99
    %v185 = vunpack.c.h.b16 %v99
    %v186 = vunpack.c.l.b16 %v100
    %v187 = vunpack.c.h.b16 %v100
    %v188 = vunpack.c.l.b16 %v101
    %v189 = vunpack.c.h.b16 %v101
    %v190 = vunpack.c.l.b16 %v102
    %v191 = vunpack.c.h.b16 %v102
    %v192 = vunpack.c.l.b16 %v103
    %v193 = vunpack.c.h.b16 %v103
    %v194 = vunpack.c.l.b16 %v104
    %v195 = vunpack.c.h.b16 %v104
    %v196 = vunpack.c.l.b16 %v105
    %v197 = vunpack.c.h.b16 %v105
    %v198 = vunpack.c.l.b16 %v106
    %v199 = vunpack.c.h.b16 %v106
    %v200 = vunpack.c.l.b16 %v107
    %v201 = vunpack.c.h.b16 %v107
    %v202 = vunpack.c.l.b16 %v108
    %v203 = vunpack.c.h.b16 %v108
    %v204 = vunpack.c.l.b16 %v109
    %v205 = vunpack.c.h.b16 %v109
    %v206 = vpack.c.b16 %v146, %v142
    %v207 = vpack.c.b16 %v147, %v143
    %v208 = vpack.c.b16 %v148, %v144
    %v209 = vpack.c.b16 %v149, %v145
    %v210 = vpack.c.b16 %v154, %v150
    %v211 = vpack.c.b16 %v155, %v151
    %v212 = vpack.c.b16 %v156, %v152
    %v213 = vpack.c.b16 %v157, %v153
    %v214 = vpack.c.b16 %v162, %v158
    %v215 = vpack.c.b16 %v163, %v159
    %v216 = vpack.c.b16 %v164, %v160
    %v217 = vpack.c.b16 %v165, %v161
    %v218 = vpack.c.b16 %v170, %v166
    %v219 = vpack.c.b16 %v171, %v167
    %v220 = vpack.c.b16 %v172, %v168
    %v221 = vpack.c.b16 %v173, %v169
    %v222 = vpack.c.b16 %v178, %v174
    %v223 = vpack.c.b16 %v179, %v175
    %v224 = vpack.c.b16 %v180, %v176
    %v225 = vpack.c.b16 %v181, %v177
    %v226 = vpack.c.b16 %v186, %v182
    %v227 = vpack.c.b16 %v187, %v183
    %v228 = vpack.c.b16 %v188, %v184
    %v229 = vpack.c.b16 %v189, %v185
    %v230 = vpack.c.b16 %v194, %v190
    %v231 = vpack.c.b16 %v195, %v191
    %v232 = vpack.c.b16 %v196, %v192
    %v233 = vpack.c.b16 %v197, %v193
    %v234 = vpack.c.b16 %v202, %v198
    %v235 = vpack.c.b16 %v203, %v199
    %v236 = vpack.c.b16 %v204, %v200
    %v237 = vpack.c.b16 %v205, %v201
    %270 = vmatprep.subr.bf16.mxu0 %v207
    %271 = vmatpush1.bf16.msra.mxu0 %v206
    %272 = vmatprep.subr.bf16.mxu0 %v211
    %273 = vmatpush1.bf16.msra.mxu0 %v210
    %274 = vmatprep.subr.bf16.mxu0 %v215
    %275 = vmatpush1.bf16.msra.mxu0 %v214
    %276 = vmatprep.subr.bf16.mxu0 %v219
    %277 = vmatpush1.bf16.msra.mxu0 %v218
    %278 = vmatprep.subr.bf16.mxu0 %v223
    %279 = vmatpush1.bf16.msra.mxu0 %v222
    %280 = vmatprep.subr.bf16.mxu0 %v227
    %281 = vmatpush1.bf16.msra.mxu0 %v226
    %282 = vmatprep.subr.bf16.mxu0 %v231
    %283 = vmatpush1.bf16.msra.mxu0 %v230
    %284 = vmatprep.subr.bf16.mxu0 %v235
    %285 = vmatpush1.bf16.msra.mxu0 %v234
    %286 = vmatprep.subr.bf16.mxu0 0
    %287 = vmatpush1.bf16.msra.mxu0 0
    %288 = vmatprep.subr.bf16.mxu0 0
    %289 = vmatpush1.bf16.msra.mxu0 0
    %290 = vmatprep.subr.bf16.mxu0 0
    %291 = vmatpush1.bf16.msra.mxu0 0
    %292 = vmatprep.subr.bf16.mxu0 0
    %293 = vmatpush1.bf16.msra.mxu0 0
    %294 = vmatprep.subr.bf16.mxu0 0
    %295 = vmatpush1.bf16.msra.mxu0 0
    %296 = vmatprep.subr.bf16.mxu0 0
    %297 = vmatpush1.bf16.msra.mxu0 0
    %298 = vmatprep.subr.bf16.mxu0 0
    %299 = vmatpush1.bf16.msra.mxu0 0
    %300 = vmatprep.subr.bf16.mxu0 0
    %301 = vmatpush1.bf16.msra.mxu0 0
    %302 = vmatprep.mubr.bf16.mxu0 0
    %303 = vmatmul.mubr.bf16.gmra.mrb[0].mxu0 %v77
    %v304 = vpop.f32.mrb[0].mxu0
    %v305 = vadd.f32 0.0, %v304
    %v306 = vpop.f32.mrb[0].mxu0
    %v307 = vadd.f32 0.0, %v306
    %v308 = vpop.f32.mrb[0].mxu0
    %v309 = vpop.f32.mrb[0].mxu0
    %310 = vdwg.mxu0
    %311 = vmatprep.subr.bf16.mxu0 %v209
    %312 = vmatpush1.bf16.msra.mxu0 %v208
    %313 = vmatprep.subr.bf16.mxu0 %v213
    %314 = vmatpush1.bf16.msra.mxu0 %v212
    %315 = vmatprep.subr.bf16.mxu0 %v217
    %316 = vmatpush1.bf16.msra.mxu0 %v216
    %317 = vmatprep.subr.bf16.mxu0 %v221
    %318 = vmatpush1.bf16.msra.mxu0 %v220
    %319 = vmatprep.subr.bf16.mxu0 %v225
    %320 = vmatpush1.bf16.msra.mxu0 %v224
    %321 = vmatprep.subr.bf16.mxu0 %v229
    %322 = vmatpush1.bf16.msra.mxu0 %v228
    %323 = vmatprep.subr.bf16.mxu0 %v233
    %324 = vmatpush1.bf16.msra.mxu0 %v232
    %325 = vmatprep.subr.bf16.mxu0 %v237
    %326 = vmatpush1.bf16.msra.mxu0 %v236
    %327 = vmatprep.subr.bf16.mxu0 0
    %328 = vmatpush1.bf16.msra.mxu0 0
    %329 = vmatprep.subr.bf16.mxu0 0
    %330 = vmatpush1.bf16.msra.mxu0 0
    %331 = vmatprep.subr.bf16.mxu0 0
    %332 = vmatpush1.bf16.msra.mxu0 0
    %333 = vmatprep.subr.bf16.mxu0 0
    %334 = vmatpush1.bf16.msra.mxu0 0
    %335 = vmatprep.subr.bf16.mxu0 0
    %336 = vmatpush1.bf16.msra.mxu0 0
    %337 = vmatprep.subr.bf16.mxu0 0
    %338 = vmatpush1.bf16.msra.mxu0 0
    %339 = vmatprep.subr.bf16.mxu0 0
    %340 = vmatpush1.bf16.msra.mxu0 0
    %341 = vmatprep.subr.bf16.mxu0 0
    %342 = vmatpush1.bf16.msra.mxu0 0
    %343 = vmatprep.mubr.bf16.mxu0 0
    %344 = vmatmul.mubr.bf16.gmra.mrb[0].mxu0 %v77
    %v345 = vpop.f32.mrb[0].mxu0
    %v346 = vadd.f32 0.0, %v345
    %v347 = vpop.f32.mrb[0].mxu0
    %v348 = vadd.f32 0.0, %v347
    %v349 = vpop.f32.mrb[0].mxu0
    %v350 = vpop.f32.mrb[0].mxu0
    %351 = vdwg.mxu0
    %v356 = vcombine.low %v305, %v307
    %v357 = vcombine.low %v346, %v348
    %v359 = vunpack.c.l.s4 1966171168
    %v360 = vunpack.c.0.s8 %v359
    %v361 = vlaneseq
    %v362 = vshrl.u32 %v361, 7
    %v363 = vsub.s32 %v360, %v362
    %v364 = vrot.slane %v356, %v363
    %v366 = vunpack.c.l.s4 1966171168
    %v367 = vunpack.c.0.s8 %v366
    %v368 = vlaneseq
    %v369 = vshrl.u32 %v368, 7
    %v370 = vsub.s32 %v367, %v369
    %v371 = vrot.slane %v357, %v370
    %v372 = vcombine.low %v364, %v371
    %v374 = vunpack.c.l.s4 1966171168
    %v375 = vunpack.c.0.s8 %v374
    %v376 = vlaneseq
    %v377 = vshrl.u32 %v376, 7
    %v378 = vsub.s32 %v375, %v377
    %v379 = vrot.slane %v372, %v378
    %v381 = vadd.f32 %v76, %v379
    %v382 = vtanh.pop %v381
    %v383 = vmul.f32 %v382, 0.5
    %v384 = vadd.f32 %v383, 0.5
    %v386 = vrot.slane %v382, 1
    %v388 = vmul.f32 %v386, 0.5
    %v389 = vadd.f32 %v388, 0.5
    %v390 = vrot.slane %v382, 3
    %v392 = vmul.f32 %v390, 0.5
    %v393 = vadd.f32 %v392, 0.5
    %v394 = vmul.f32 %v389, %v70
    %v395 = vrot.slane %v382, 2
    %v397 = vmul.f32 %v384, %v395
    %v398 = vadd.f32 %v394, %v397
    %v399 = vtanh.pop %v398
    %v400 = vmul.f32 %v393, %v399
    %s401 = sld [smem:[#allocation3 + $0x2]]
    %v402 = vstv %s401
    %v403 = vmul.f32 %v402, %v54
    %v404 = vadd.f32 %v403, %v55
    %v405 = vpack.c.bf16 %v400, %v400
    %406 = vmatprep.subr.bf16.mxu0 %v207
    %407 = vmatpush1.bf16.msra.mxu0 %v206
    %408 = vmatprep.subr.bf16.mxu0 %v211
    %409 = vmatpush1.bf16.msra.mxu0 %v210
    %410 = vmatprep.subr.bf16.mxu0 %v215
    %411 = vmatpush1.bf16.msra.mxu0 %v214
    %412 = vmatprep.subr.bf16.mxu0 %v219
    %413 = vmatpush1.bf16.msra.mxu0 %v218
    %414 = vmatprep.subr.bf16.mxu0 %v223
    %415 = vmatpush1.bf16.msra.mxu0 %v222
    %416 = vmatprep.subr.bf16.mxu0 %v227
    %417 = vmatpush1.bf16.msra.mxu0 %v226
    %418 = vmatprep.subr.bf16.mxu0 %v231
    %419 = vmatpush1.bf16.msra.mxu0 %v230
    %420 = vmatprep.subr.bf16.mxu0 %v235
    %421 = vmatpush1.bf16.msra.mxu0 %v234
    %422 = vmatprep.subr.bf16.mxu0 0
    %423 = vmatpush1.bf16.msra.mxu0 0
    %424 = vmatprep.subr.bf16.mxu0 0
    %425 = vmatpush1.bf16.msra.mxu0 0
    %426 = vmatprep.subr.bf16.mxu0 0
    %427 = vmatpush1.bf16.msra.mxu0 0
    %428 = vmatprep.subr.bf16.mxu0 0
    %429 = vmatpush1.bf16.msra.mxu0 0
    %430 = vmatprep.subr.bf16.mxu0 0
    %431 = vmatpush1.bf16.msra.mxu0 0
    %432 = vmatprep.subr.bf16.mxu0 0
    %433 = vmatpush1.bf16.msra.mxu0 0
    %434 = vmatprep.subr.bf16.mxu0 0
    %435 = vmatpush1.bf16.msra.mxu0 0
    %436 = vmatprep.subr.bf16.mxu0 0
    %437 = vmatpush1.bf16.msra.mxu0 0
    %438 = vmatprep.mubr.bf16.mxu0 0
    %439 = vmatmul.mubr.bf16.gmra.mrb[0].mxu0 %v405
    %v440 = vpop.f32.mrb[0].mxu0
    %v441 = vadd.f32 0.0, %v440
    %v442 = vpop.f32.mrb[0].mxu0
    %v443 = vadd.f32 0.0, %v442
    %v444 = vpop.f32.mrb[0].mxu0
    %v445 = vpop.f32.mrb[0].mxu0
    %446 = vdwg.mxu0
    %447 = vmatprep.subr.bf16.mxu0 %v209
    %448 = vmatpush1.bf16.msra.mxu0 %v208
    %449 = vmatprep.subr.bf16.mxu0 %v213
    %450 = vmatpush1.bf16.msra.mxu0 %v212
    %451 = vmatprep.subr.bf16.mxu0 %v217
    %452 = vmatpush1.bf16.msra.mxu0 %v216
    %453 = vmatprep.subr.bf16.mxu0 %v221
    %454 = vmatpush1.bf16.msra.mxu0 %v220
    %455 = vmatprep.subr.bf16.mxu0 %v225
    %456 = vmatpush1.bf16.msra.mxu0 %v224
    %457 = vmatprep.subr.bf16.mxu0 %v229
    %458 = vmatpush1.bf16.msra.mxu0 %v228
    %459 = vmatprep.subr.bf16.mxu0 %v233
    %460 = vmatpush1.bf16.msra.mxu0 %v232
    %461 = vmatprep.subr.bf16.mxu0 %v237
    %462 = vmatpush1.bf16.msra.mxu0 %v236
    %463 = vmatprep.subr.bf16.mxu0 0
    %464 = vmatpush1.bf16.msra.mxu0 0
    %465 = vmatprep.subr.bf16.mxu0 0
    %466 = vmatpush1.bf16.msra.mxu0 0
    %467 = vmatprep.subr.bf16.mxu0 0
    %468 = vmatpush1.bf16.msra.mxu0 0
    %469 = vmatprep.subr.bf16.mxu0 0
    %470 = vmatpush1.bf16.msra.mxu0 0
    %471 = vmatprep.subr.bf16.mxu0 0
    %472 = vmatpush1.bf16.msra.mxu0 0
    %473 = vmatprep.subr.bf16.mxu0 0
    %474 = vmatpush1.bf16.msra.mxu0 0
    %475 = vmatprep.subr.bf16.mxu0 0
    %476 = vmatpush1.bf16.msra.mxu0 0
    %477 = vmatprep.subr.bf16.mxu0 0
    %478 = vmatpush1.bf16.msra.mxu0 0
    %479 = vmatprep.mubr.bf16.mxu0 0
    %480 = vmatmul.mubr.bf16.gmra.mrb[0].mxu0 %v405
    %v481 = vpop.f32.mrb[0].mxu0
    %v482 = vadd.f32 0.0, %v481
    %v483 = vpop.f32.mrb[0].mxu0
    %v484 = vadd.f32 0.0, %v483
    %v485 = vpop.f32.mrb[0].mxu0
    %v486 = vpop.f32.mrb[0].mxu0
    %487 = vdwg.mxu0
    %v492 = vcombine.low %v441, %v443
    %v493 = vcombine.low %v482, %v484
    %v495 = vunpack.c.l.s4 1966171168
    %v496 = vunpack.c.0.s8 %v495
    %v497 = vlaneseq
    %v498 = vshrl.u32 %v497, 7
    %v499 = vsub.s32 %v496, %v498
    %v500 = vrot.slane %v492, %v499
    %v502 = vunpack.c.l.s4 1966171168
    %v503 = vunpack.c.0.s8 %v502
    %v504 = vlaneseq
    %v505 = vshrl.u32 %v504, 7
    %v506 = vsub.s32 %v503, %v505
    %v507 = vrot.slane %v493, %v506
    %v508 = vcombine.low %v500, %v507
    %v510 = vunpack.c.l.s4 1966171168
    %v511 = vunpack.c.0.s8 %v510
    %v512 = vlaneseq
    %v513 = vshrl.u32 %v512, 7
    %v514 = vsub.s32 %v511, %v513
    %v515 = vrot.slane %v508, %v514
    %v517 = vadd.f32 %v404, %v515
    %v518 = vtanh.pop %v517
    %v519 = vmul.f32 %v518, 0.5
    %v520 = vadd.f32 %v519, 0.5
    %v522 = vrot.slane %v518, 1
    %v524 = vmul.f32 %v522, 0.5
    %v525 = vadd.f32 %v524, 0.5
    %v526 = vrot.slane %v518, 3
    %v528 = vmul.f32 %v526, 0.5
    %v529 = vadd.f32 %v528, 0.5
    %v530 = vmul.f32 %v525, %v398
    %v531 = vrot.slane %v518, 2
    %v533 = vmul.f32 %v520, %v531
    %v534 = vadd.f32 %v530, %v533
    %v535 = vtanh.pop %v534
    %v536 = vmul.f32 %v529, %v535
    %s537 = sld [smem:[#allocation3 + $0x3]]
    %v538 = vstv %s537
    %v539 = vmul.f32 %v538, %v54
    %v540 = vadd.f32 %v539, %v55
    %v541 = vpack.c.bf16 %v536, %v536
    %542 = vmatprep.subr.bf16.mxu0 %v207
    %543 = vmatpush1.bf16.msra.mxu0 %v206
    %544 = vmatprep.subr.bf16.mxu0 %v211
    %545 = vmatpush1.bf16.msra.mxu0 %v210
    %546 = vmatprep.subr.bf16.mxu0 %v215
    %547 = vmatpush1.bf16.msra.mxu0 %v214
    %548 = vmatprep.subr.bf16.mxu0 %v219
    %549 = vmatpush1.bf16.msra.mxu0 %v218
    %550 = vmatprep.subr.bf16.mxu0 %v223
    %551 = vmatpush1.bf16.msra.mxu0 %v222
    %552 = vmatprep.subr.bf16.mxu0 %v227
    %553 = vmatpush1.bf16.msra.mxu0 %v226
    %554 = vmatprep.subr.bf16.mxu0 %v231
    %555 = vmatpush1.bf16.msra.mxu0 %v230
    %556 = vmatprep.subr.bf16.mxu0 %v235
    %557 = vmatpush1.bf16.msra.mxu0 %v234
    %558 = vmatprep.subr.bf16.mxu0 0
    %559 = vmatpush1.bf16.msra.mxu0 0
    %560 = vmatprep.subr.bf16.mxu0 0
    %561 = vmatpush1.bf16.msra.mxu0 0
    %562 = vmatprep.subr.bf16.mxu0 0
    %563 = vmatpush1.bf16.msra.mxu0 0
    %564 = vmatprep.subr.bf16.mxu0 0
    %565 = vmatpush1.bf16.msra.mxu0 0
    %566 = vmatprep.subr.bf16.mxu0 0
    %567 = vmatpush1.bf16.msra.mxu0 0
    %568 = vmatprep.subr.bf16.mxu0 0
    %569 = vmatpush1.bf16.msra.mxu0 0
    %570 = vmatprep.subr.bf16.mxu0 0
    %571 = vmatpush1.bf16.msra.mxu0 0
    %572 = vmatprep.subr.bf16.mxu0 0
    %573 = vmatpush1.bf16.msra.mxu0 0
    %574 = vmatprep.mubr.bf16.mxu0 0
    %575 = vmatmul.mubr.bf16.gmra.mrb[0].mxu0 %v541
    %v576 = vpop.f32.mrb[0].mxu0
    %v577 = vadd.f32 0.0, %v576
    %v578 = vpop.f32.mrb[0].mxu0
    %v579 = vadd.f32 0.0, %v578
    %v580 = vpop.f32.mrb[0].mxu0
    %v581 = vpop.f32.mrb[0].mxu0
    %582 = vdwg.mxu0
    %583 = vmatprep.subr.bf16.mxu0 %v209
    %584 = vmatpush1.bf16.msra.mxu0 %v208
    %585 = vmatprep.subr.bf16.mxu0 %v213
    %586 = vmatpush1.bf16.msra.mxu0 %v212
    %587 = vmatprep.subr.bf16.mxu0 %v217
    %588 = vmatpush1.bf16.msra.mxu0 %v216
    %589 = vmatprep.subr.bf16.mxu0 %v221
    %590 = vmatpush1.bf16.msra.mxu0 %v220
    %591 = vmatprep.subr.bf16.mxu0 %v225
    %592 = vmatpush1.bf16.msra.mxu0 %v224
    %593 = vmatprep.subr.bf16.mxu0 %v229
    %594 = vmatpush1.bf16.msra.mxu0 %v228
    %595 = vmatprep.subr.bf16.mxu0 %v233
    %596 = vmatpush1.bf16.msra.mxu0 %v232
    %597 = vmatprep.subr.bf16.mxu0 %v237
    %598 = vmatpush1.bf16.msra.mxu0 %v236
    %599 = vmatprep.subr.bf16.mxu0 0
    %600 = vmatpush1.bf16.msra.mxu0 0
    %601 = vmatprep.subr.bf16.mxu0 0
    %602 = vmatpush1.bf16.msra.mxu0 0
    %603 = vmatprep.subr.bf16.mxu0 0
    %604 = vmatpush1.bf16.msra.mxu0 0
    %605 = vmatprep.subr.bf16.mxu0 0
    %606 = vmatpush1.bf16.msra.mxu0 0
    %607 = vmatprep.subr.bf16.mxu0 0
    %608 = vmatpush1.bf16.msra.mxu0 0
    %609 = vmatprep.subr.bf16.mxu0 0
    %610 = vmatpush1.bf16.msra.mxu0 0
    %611 = vmatprep.subr.bf16.mxu0 0
    %612 = vmatpush1.bf16.msra.mxu0 0
    %613 = vmatprep.subr.bf16.mxu0 0
    %614 = vmatpush1.bf16.msra.mxu0 0
    %615 = vmatprep.mubr.bf16.mxu0 0
    %616 = vmatmul.mubr.bf16.gmra.mrb[0].mxu0 %v541
    %v617 = vpop.f32.mrb[0].mxu0
    %v618 = vadd.f32 0.0, %v617
    %v619 = vpop.f32.mrb[0].mxu0
    %v620 = vadd.f32 0.0, %v619
    %v621 = vpop.f32.mrb[0].mxu0
    %v622 = vpop.f32.mrb[0].mxu0
    %623 = vdwg.mxu0
    %v628 = vcombine.low %v577, %v579
    %v629 = vcombine.low %v618, %v620
    %v631 = vunpack.c.l.s4 1966171168
    %v632 = vunpack.c.0.s8 %v631
    %v633 = vlaneseq
    %v634 = vshrl.u32 %v633, 7
    %v635 = vsub.s32 %v632, %v634
    %v636 = vrot.slane %v628, %v635
    %v638 = vunpack.c.l.s4 1966171168
    %v639 = vunpack.c.0.s8 %v638
    %v640 = vlaneseq
    %v641 = vshrl.u32 %v640, 7
    %v642 = vsub.s32 %v639, %v641
    %v643 = vrot.slane %v629, %v642
    %v644 = vcombine.low %v636, %v643
    %v646 = vunpack.c.l.s4 1966171168
    %v647 = vunpack.c.0.s8 %v646
    %v648 = vlaneseq
    %v649 = vshrl.u32 %v648, 7
    %v650 = vsub.s32 %v647, %v649
    %v651 = vrot.slane %v644, %v650
    %v653 = vadd.f32 %v540, %v651
    %v654 = vtanh.pop %v653
    %v655 = vmul.f32 %v654, 0.5
    %v656 = vadd.f32 %v655, 0.5
    %v658 = vrot.slane %v654, 1
    %v660 = vmul.f32 %v658, 0.5
    %v661 = vadd.f32 %v660, 0.5
    %v662 = vrot.slane %v654, 3
    %v664 = vmul.f32 %v662, 0.5
    %v665 = vadd.f32 %v664, 0.5
    %v666 = vmul.f32 %v661, %v534
    %v667 = vrot.slane %v654, 2
    %v669 = vmul.f32 %v656, %v667
    %v670 = vadd.f32 %v666, %v669
    %v671 = vtanh.pop %v670
    %v672 = vmul.f32 %v665, %v671
    %s673 = sld [smem:[#allocation3 + $0x4]]
    %v674 = vstv %s673
    %v675 = vmul.f32 %v674, %v54
    %v676 = vadd.f32 %v675, %v55
    %v677 = vpack.c.bf16 %v672, %v672
    %678 = vmatprep.subr.bf16.mxu0 %v207
    %679 = vmatpush1.bf16.msra.mxu0 %v206
    %680 = vmatprep.subr.bf16.mxu0 %v211
    %681 = vmatpush1.bf16.msra.mxu0 %v210
    %682 = vmatprep.subr.bf16.mxu0 %v215
    %683 = vmatpush1.bf16.msra.mxu0 %v214
    %684 = vmatprep.subr.bf16.mxu0 %v219
    %685 = vmatpush1.bf16.msra.mxu0 %v218
    %686 = vmatprep.subr.bf16.mxu0 %v223
    %687 = vmatpush1.bf16.msra.mxu0 %v222
    %688 = vmatprep.subr.bf16.mxu0 %v227
    %689 = vmatpush1.bf16.msra.mxu0 %v226
    %690 = vmatprep.subr.bf16.mxu0 %v231
    %691 = vmatpush1.bf16.msra.mxu0 %v230
    %692 = vmatprep.subr.bf16.mxu0 %v235
    %693 = vmatpush1.bf16.msra.mxu0 %v234
    %694 = vmatprep.subr.bf16.mxu0 0
    %695 = vmatpush1.bf16.msra.mxu0 0
    %696 = vmatprep.subr.bf16.mxu0 0
    %697 = vmatpush1.bf16.msra.mxu0 0
    %698 = vmatprep.subr.bf16.mxu0 0
    %699 = vmatpush1.bf16.msra.mxu0 0
    %700 = vmatprep.subr.bf16.mxu0 0
    %701 = vmatpush1.bf16.msra.mxu0 0
    %702 = vmatprep.subr.bf16.mxu0 0
    %703 = vmatpush1.bf16.msra.mxu0 0
    %704 = vmatprep.subr.bf16.mxu0 0
    %705 = vmatpush1.bf16.msra.mxu0 0
    %706 = vmatprep.subr.bf16.mxu0 0
    %707 = vmatpush1.bf16.msra.mxu0 0
    %708 = vmatprep.subr.bf16.mxu0 0
    %709 = vmatpush1.bf16.msra.mxu0 0
    %710 = vmatprep.mubr.bf16.mxu0 0
    %711 = vmatmul.mubr.bf16.gmra.mrb[0].mxu0 %v677
    %v712 = vpop.f32.mrb[0].mxu0
    %v713 = vadd.f32 0.0, %v712
    %v714 = vpop.f32.mrb[0].mxu0
    %v715 = vadd.f32 0.0, %v714
    %v716 = vpop.f32.mrb[0].mxu0
    %v717 = vpop.f32.mrb[0].mxu0
    %718 = vdwg.mxu0
    %719 = vmatprep.subr.bf16.mxu0 %v209
    %720 = vmatpush1.bf16.msra.mxu0 %v208
    %721 = vmatprep.subr.bf16.mxu0 %v213
    %722 = vmatpush1.bf16.msra.mxu0 %v212
    %723 = vmatprep.subr.bf16.mxu0 %v217
    %724 = vmatpush1.bf16.msra.mxu0 %v216
    %725 = vmatprep.subr.bf16.mxu0 %v221
    %726 = vmatpush1.bf16.msra.mxu0 %v220
    %727 = vmatprep.subr.bf16.mxu0 %v225
    %728 = vmatpush1.bf16.msra.mxu0 %v224
    %729 = vmatprep.subr.bf16.mxu0 %v229
    %730 = vmatpush1.bf16.msra.mxu0 %v228
    %731 = vmatprep.subr.bf16.mxu0 %v233
    %732 = vmatpush1.bf16.msra.mxu0 %v232
    %733 = vmatprep.subr.bf16.mxu0 %v237
    %734 = vmatpush1.bf16.msra.mxu0 %v236
    %735 = vmatprep.subr.bf16.mxu0 0
    %736 = vmatpush1.bf16.msra.mxu0 0
    %737 = vmatprep.subr.bf16.mxu0 0
    %738 = vmatpush1.bf16.msra.mxu0 0
    %739 = vmatprep.subr.bf16.mxu0 0
    %740 = vmatpush1.bf16.msra.mxu0 0
    %741 = vmatprep.subr.bf16.mxu0 0
    %742 = vmatpush1.bf16.msra.mxu0 0
    %743 = vmatprep.subr.bf16.mxu0 0
    %744 = vmatpush1.bf16.msra.mxu0 0
    %745 = vmatprep.subr.bf16.mxu0 0
    %746 = vmatpush1.bf16.msra.mxu0 0
    %747 = vmatprep.subr.bf16.mxu0 0
    %748 = vmatpush1.bf16.msra.mxu0 0
    %749 = vmatprep.subr.bf16.mxu0 0
    %750 = vmatpush1.bf16.msra.mxu0 0
    %751 = vmatprep.mubr.bf16.mxu0 0
    %752 = vmatmul.mubr.bf16.gmra.mrb[0].mxu0 %v677
    %v753 = vpop.f32.mrb[0].mxu0
    %v754 = vadd.f32 0.0, %v753
    %v755 = vpop.f32.mrb[0].mxu0
    %v756 = vadd.f32 0.0, %v755
    %v757 = vpop.f32.mrb[0].mxu0
    %v758 = vpop.f32.mrb[0].mxu0
    %759 = vdwg.mxu0
    %v764 = vcombine.low %v713, %v715
    %v765 = vcombine.low %v754, %v756
    %v767 = vunpack.c.l.s4 1966171168
    %v768 = vunpack.c.0.s8 %v767
    %v769 = vlaneseq
    %v770 = vshrl.u32 %v769, 7
    %v771 = vsub.s32 %v768, %v770
    %v772 = vrot.slane %v764, %v771
    %v774 = vunpack.c.l.s4 1966171168
    %v775 = vunpack.c.0.s8 %v774
    %v776 = vlaneseq
    %v777 = vshrl.u32 %v776, 7
    %v778 = vsub.s32 %v775, %v777
    %v779 = vrot.slane %v765, %v778
    %v780 = vcombine.low %v772, %v779
    %v782 = vunpack.c.l.s4 1966171168
    %v783 = vunpack.c.0.s8 %v782
    %v784 = vlaneseq
    %v785 = vshrl.u32 %v784, 7
    %v786 = vsub.s32 %v783, %v785
    %v787 = vrot.slane %v780, %v786
    %v789 = vadd.f32 %v676, %v787
    %v790 = vtanh.pop %v789
    %v791 = vmul.f32 %v790, 0.5
    %v792 = vadd.f32 %v791, 0.5
    %v794 = vrot.slane %v790, 1
    %v796 = vmul.f32 %v794, 0.5
    %v797 = vadd.f32 %v796, 0.5
    %v798 = vrot.slane %v790, 3
    %v800 = vmul.f32 %v798, 0.5
    %v801 = vadd.f32 %v800, 0.5
    %v802 = vmul.f32 %v797, %v670
    %v803 = vrot.slane %v790, 2
    %v805 = vmul.f32 %v792, %v803
    %v806 = vadd.f32 %v802, %v805
    %v807 = vtanh.pop %v806
    %v808 = vmul.f32 %v801, %v807
    %s809 = sld [smem:[#allocation3 + $0x5]]
    %v810 = vstv %s809
    %v811 = vmul.f32 %v810, %v54
    %v812 = vadd.f32 %v811, %v55
    %v813 = vpack.c.bf16 %v808, %v808
    %814 = vmatprep.subr.bf16.mxu0 %v207
    %815 = vmatpush1.bf16.msra.mxu0 %v206
    %816 = vmatprep.subr.bf16.mxu0 %v211
    %817 = vmatpush1.bf16.msra.mxu0 %v210
    %818 = vmatprep.subr.bf16.mxu0 %v215
    %819 = vmatpush1.bf16.msra.mxu0 %v214
    %820 = vmatprep.subr.bf16.mxu0 %v219
    %821 = vmatpush1.bf16.msra.mxu0 %v218
    %822 = vmatprep.subr.bf16.mxu0 %v223
    %823 = vmatpush1.bf16.msra.mxu0 %v222
    %824 = vmatprep.subr.bf16.mxu0 %v227
    %825 = vmatpush1.bf16.msra.mxu0 %v226
    %826 = vmatprep.subr.bf16.mxu0 %v231
    %827 = vmatpush1.bf16.msra.mxu0 %v230
    %828 = vmatprep.subr.bf16.mxu0 %v235
    %829 = vmatpush1.bf16.msra.mxu0 %v234
    %830 = vmatprep.subr.bf16.mxu0 0
    %831 = vmatpush1.bf16.msra.mxu0 0
    %832 = vmatprep.subr.bf16.mxu0 0
    %833 = vmatpush1.bf16.msra.mxu0 0
    %834 = vmatprep.subr.bf16.mxu0 0
    %835 = vmatpush1.bf16.msra.mxu0 0
    %836 = vmatprep.subr.bf16.mxu0 0
    %837 = vmatpush1.bf16.msra.mxu0 0
    %838 = vmatprep.subr.bf16.mxu0 0
    %839 = vmatpush1.bf16.msra.mxu0 0
    %840 = vmatprep.subr.bf16.mxu0 0
    %841 = vmatpush1.bf16.msra.mxu0 0
    %842 = vmatprep.subr.bf16.mxu0 0
    %843 = vmatpush1.bf16.msra.mxu0 0
    %844 = vmatprep.subr.bf16.mxu0 0
    %845 = vmatpush1.bf16.msra.mxu0 0
    %846 = vmatprep.mubr.bf16.mxu0 0
    %847 = vmatmul.mubr.bf16.gmra.mrb[0].mxu0 %v813
    %v848 = vpop.f32.mrb[0].mxu0
    %v849 = vadd.f32 0.0, %v848
    %v850 = vpop.f32.mrb[0].mxu0
    %v851 = vadd.f32 0.0, %v850
    %v852 = vpop.f32.mrb[0].mxu0
    %v853 = vpop.f32.mrb[0].mxu0
    %854 = vdwg.mxu0
    %855 = vmatprep.subr.bf16.mxu0 %v209
    %856 = vmatpush1.bf16.msra.mxu0 %v208
    %857 = vmatprep.subr.bf16.mxu0 %v213
    %858 = vmatpush1.bf16.msra.mxu0 %v212
    %859 = vmatprep.subr.bf16.mxu0 %v217
    %860 = vmatpush1.bf16.msra.mxu0 %v216
    %861 = vmatprep.subr.bf16.mxu0 %v221
    %862 = vmatpush1.bf16.msra.mxu0 %v220
    %863 = vmatprep.subr.bf16.mxu0 %v225
    %864 = vmatpush1.bf16.msra.mxu0 %v224
    %865 = vmatprep.subr.bf16.mxu0 %v229
    %866 = vmatpush1.bf16.msra.mxu0 %v228
    %867 = vmatprep.subr.bf16.mxu0 %v233
    %868 = vmatpush1.bf16.msra.mxu0 %v232
    %869 = vmatprep.subr.bf16.mxu0 %v237
    %870 = vmatpush1.bf16.msra.mxu0 %v236
    %871 = vmatprep.subr.bf16.mxu0 0
    %872 = vmatpush1.bf16.msra.mxu0 0
    %873 = vmatprep.subr.bf16.mxu0 0
    %874 = vmatpush1.bf16.msra.mxu0 0
    %875 = vmatprep.subr.bf16.mxu0 0
    %876 = vmatpush1.bf16.msra.mxu0 0
    %877 = vmatprep.subr.bf16.mxu0 0
    %878 = vmatpush1.bf16.msra.mxu0 0
    %879 = vmatprep.subr.bf16.mxu0 0
    %880 = vmatpush1.bf16.msra.mxu0 0
    %881 = vmatprep.subr.bf16.mxu0 0
    %882 = vmatpush1.bf16.msra.mxu0 0
    %883 = vmatprep.subr.bf16.mxu0 0
    %884 = vmatpush1.bf16.msra.mxu0 0
    %885 = vmatprep.subr.bf16.mxu0 0
    %886 = vmatpush1.bf16.msra.mxu0 0
    %887 = vmatprep.mubr.bf16.mxu0 0
    %888 = vmatmul.mubr.bf16.gmra.mrb[0].mxu0 %v813
    %v889 = vpop.f32.mrb[0].mxu0
    %v890 = vadd.f32 0.0, %v889
    %v891 = vpop.f32.mrb[0].mxu0
    %v892 = vadd.f32 0.0, %v891
    %v893 = vpop.f32.mrb[0].mxu0
    %v894 = vpop.f32.mrb[0].mxu0
    %895 = vdwg.mxu0
    %v900 = vcombine.low %v849, %v851
    %v901 = vcombine.low %v890, %v892
    %v903 = vunpack.c.l.s4 1966171168
    %v904 = vunpack.c.0.s8 %v903
    %v905 = vlaneseq
    %v906 = vshrl.u32 %v905, 7
    %v907 = vsub.s32 %v904, %v906
    %v908 = vrot.slane %v900, %v907
    %v910 = vunpack.c.l.s4 1966171168
    %v911 = vunpack.c.0.s8 %v910
    %v912 = vlaneseq
    %v913 = vshrl.u32 %v912, 7
    %v914 = vsub.s32 %v911, %v913
    %v915 = vrot.slane %v901, %v914
    %v916 = vcombine.low %v908, %v915
    %v918 = vunpack.c.l.s4 1966171168
    %v919 = vunpack.c.0.s8 %v918
    %v920 = vlaneseq
    %v921 = vshrl.u32 %v920, 7
    %v922 = vsub.s32 %v919, %v921
    %v923 = vrot.slane %v916, %v922
    %v925 = vadd.f32 %v812, %v923
    %v926 = vtanh.pop %v925
    %v927 = vmul.f32 %v926, 0.5
    %v928 = vadd.f32 %v927, 0.5
    %v930 = vrot.slane %v926, 1
    %v932 = vmul.f32 %v930, 0.5
    %v933 = vadd.f32 %v932, 0.5
    %v934 = vrot.slane %v926, 3
    %v936 = vmul.f32 %v934, 0.5
    %v937 = vadd.f32 %v936, 0.5
    %v938 = vmul.f32 %v933, %v806
    %v939 = vrot.slane %v926, 2
    %v941 = vmul.f32 %v928, %v939
    %v942 = vadd.f32 %v938, %v941
    %v943 = vtanh.pop %v942
    %v944 = vmul.f32 %v937, %v943
    %s945 = sld [smem:[#allocation3 + $0x6]]
    %v946 = vstv %s945
    %v947 = vmul.f32 %v946, %v54
    %v948 = vadd.f32 %v947, %v55
    %v949 = vpack.c.bf16 %v944, %v944
    %950 = vmatprep.subr.bf16.mxu0 %v207
    %951 = vmatpush1.bf16.msra.mxu0 %v206
    %952 = vmatprep.subr.bf16.mxu0 %v211
    %953 = vmatpush1.bf16.msra.mxu0 %v210
    %954 = vmatprep.subr.bf16.mxu0 %v215
    %955 = vmatpush1.bf16.msra.mxu0 %v214
    %956 = vmatprep.subr.bf16.mxu0 %v219
    %957 = vmatpush1.bf16.msra.mxu0 %v218
    %958 = vmatprep.subr.bf16.mxu0 %v223
    %959 = vmatpush1.bf16.msra.mxu0 %v222
    %960 = vmatprep.subr.bf16.mxu0 %v227
    %961 = vmatpush1.bf16.msra.mxu0 %v226
    %962 = vmatprep.subr.bf16.mxu0 %v231
    %963 = vmatpush1.bf16.msra.mxu0 %v230
    %964 = vmatprep.subr.bf16.mxu0 %v235
    %965 = vmatpush1.bf16.msra.mxu0 %v234
    %966 = vmatprep.subr.bf16.mxu0 0
    %967 = vmatpush1.bf16.msra.mxu0 0
    %968 = vmatprep.subr.bf16.mxu0 0
    %969 = vmatpush1.bf16.msra.mxu0 0
    %970 = vmatprep.subr.bf16.mxu0 0
    %971 = vmatpush1.bf16.msra.mxu0 0
    %972 = vmatprep.subr.bf16.mxu0 0
    %973 = vmatpush1.bf16.msra.mxu0 0
    %974 = vmatprep.subr.bf16.mxu0 0
    %975 = vmatpush1.bf16.msra.mxu0 0
    %976 = vmatprep.subr.bf16.mxu0 0
    %977 = vmatpush1.bf16.msra.mxu0 0
    %978 = vmatprep.subr.bf16.mxu0 0
    %979 = vmatpush1.bf16.msra.mxu0 0
    %980 = vmatprep.subr.bf16.mxu0 0
    %981 = vmatpush1.bf16.msra.mxu0 0
    %982 = vmatprep.mubr.bf16.mxu0 0
    %983 = vmatmul.mubr.bf16.gmra.mrb[0].mxu0 %v949
    %v984 = vpop.f32.mrb[0].mxu0
    %v985 = vadd.f32 0.0, %v984
    %v986 = vpop.f32.mrb[0].mxu0
    %v987 = vadd.f32 0.0, %v986
    %v988 = vpop.f32.mrb[0].mxu0
    %v989 = vpop.f32.mrb[0].mxu0
    %990 = vdwg.mxu0
    %991 = vmatprep.subr.bf16.mxu0 %v209
    %992 = vmatpush1.bf16.msra.mxu0 %v208
    %993 = vmatprep.subr.bf16.mxu0 %v213
    %994 = vmatpush1.bf16.msra.mxu0 %v212
    %995 = vmatprep.subr.bf16.mxu0 %v217
    %996 = vmatpush1.bf16.msra.mxu0 %v216
    %997 = vmatprep.subr.bf16.mxu0 %v221
    %998 = vmatpush1.bf16.msra.mxu0 %v220
    %999 = vmatprep.subr.bf16.mxu0 %v225
    %1000 = vmatpush1.bf16.msra.mxu0 %v224
    %1001 = vmatprep.subr.bf16.mxu0 %v229
    %1002 = vmatpush1.bf16.msra.mxu0 %v228
    %1003 = vmatprep.subr.bf16.mxu0 %v233
    %1004 = vmatpush1.bf16.msra.mxu0 %v232
    %1005 = vmatprep.subr.bf16.mxu0 %v237
    %1006 = vmatpush1.bf16.msra.mxu0 %v236
    %1007 = vmatprep.subr.bf16.mxu0 0
    %1008 = vmatpush1.bf16.msra.mxu0 0
    %1009 = vmatprep.subr.bf16.mxu0 0
    %1010 = vmatpush1.bf16.msra.mxu0 0
    %1011 = vmatprep.subr.bf16.mxu0 0
    %1012 = vmatpush1.bf16.msra.mxu0 0
    %1013 = vmatprep.subr.bf16.mxu0 0
    %1014 = vmatpush1.bf16.msra.mxu0 0
    %1015 = vmatprep.subr.bf16.mxu0 0
    %1016 = vmatpush1.bf16.msra.mxu0 0
    %1017 = vmatprep.subr.bf16.mxu0 0
    %1018 = vmatpush1.bf16.msra.mxu0 0
    %1019 = vmatprep.subr.bf16.mxu0 0
    %1020 = vmatpush1.bf16.msra.mxu0 0
    %1021 = vmatprep.subr.bf16.mxu0 0
    %1022 = vmatpush1.bf16.msra.mxu0 0
    %1023 = vmatprep.mubr.bf16.mxu0 0
    %1024 = vmatmul.mubr.bf16.gmra.mrb[0].mxu0 %v949
    %v1025 = vpop.f32.mrb[0].mxu0
    %v1026 = vadd.f32 0.0, %v1025
    %v1027 = vpop.f32.mrb[0].mxu0
    %v1028 = vadd.f32 0.0, %v1027
    %v1029 = vpop.f32.mrb[0].mxu0
    %v1030 = vpop.f32.mrb[0].mxu0
    %1031 = vdwg.mxu0
    %v1036 = vcombine.low %v985, %v987
    %v1037 = vcombine.low %v1026, %v1028
    %v1039 = vunpack.c.l.s4 1966171168
    %v1040 = vunpack.c.0.s8 %v1039
    %v1041 = vlaneseq
    %v1042 = vshrl.u32 %v1041, 7
    %v1043 = vsub.s32 %v1040, %v1042
    %v1044 = vrot.slane %v1036, %v1043
    %v1046 = vunpack.c.l.s4 1966171168
    %v1047 = vunpack.c.0.s8 %v1046
    %v1048 = vlaneseq
    %v1049 = vshrl.u32 %v1048, 7
    %v1050 = vsub.s32 %v1047, %v1049
    %v1051 = vrot.slane %v1037, %v1050
    %v1052 = vcombine.low %v1044, %v1051
    %v1054 = vunpack.c.l.s4 1966171168
    %v1055 = vunpack.c.0.s8 %v1054
    %v1056 = vlaneseq
    %v1057 = vshrl.u32 %v1056, 7
    %v1058 = vsub.s32 %v1055, %v1057
    %v1059 = vrot.slane %v1052, %v1058
    %v1061 = vadd.f32 %v948, %v1059
    %v1062 = vtanh.pop %v1061
    %v1063 = vmul.f32 %v1062, 0.5
    %v1064 = vadd.f32 %v1063, 0.5
    %v1066 = vrot.slane %v1062, 1
    %v1068 = vmul.f32 %v1066, 0.5
    %v1069 = vadd.f32 %v1068, 0.5
    %v1070 = vrot.slane %v1062, 3
    %v1072 = vmul.f32 %v1070, 0.5
    %v1073 = vadd.f32 %v1072, 0.5
    %v1074 = vmul.f32 %v1069, %v942
    %v1075 = vrot.slane %v1062, 2
    %v1077 = vmul.f32 %v1064, %v1075
    %v1078 = vadd.f32 %v1074, %v1077
    %v1079 = vtanh.pop %v1078
    %v1080 = vmul.f32 %v1073, %v1079
    %s1081 = sld [smem:[#allocation3 + $0x7]]
    %v1082 = vstv %s1081
    %v1083 = vmul.f32 %v1082, %v54
    %v1084 = vadd.f32 %v1083, %v55
    %v1085 = vpack.c.bf16 %v1080, %v1080
    %1086 = vmatprep.subr.bf16.mxu0 %v207
    %1087 = vmatpush1.bf16.msra.mxu0 %v206
    %1088 = vmatprep.subr.bf16.mxu0 %v211
    %1089 = vmatpush1.bf16.msra.mxu0 %v210
    %1090 = vmatprep.subr.bf16.mxu0 %v215
    %1091 = vmatpush1.bf16.msra.mxu0 %v214
    %1092 = vmatprep.subr.bf16.mxu0 %v219
    %1093 = vmatpush1.bf16.msra.mxu0 %v218
    %1094 = vmatprep.subr.bf16.mxu0 %v223
    %1095 = vmatpush1.bf16.msra.mxu0 %v222
    %1096 = vmatprep.subr.bf16.mxu0 %v227
    %1097 = vmatpush1.bf16.msra.mxu0 %v226
    %1098 = vmatprep.subr.bf16.mxu0 %v231
    %1099 = vmatpush1.bf16.msra.mxu0 %v230
    %1100 = vmatprep.subr.bf16.mxu0 %v235
    %1101 = vmatpush1.bf16.msra.mxu0 %v234
    %1102 = vmatprep.subr.bf16.mxu0 0
    %1103 = vmatpush1.bf16.msra.mxu0 0
    %1104 = vmatprep.subr.bf16.mxu0 0
    %1105 = vmatpush1.bf16.msra.mxu0 0
    %1106 = vmatprep.subr.bf16.mxu0 0
    %1107 = vmatpush1.bf16.msra.mxu0 0
    %1108 = vmatprep.subr.bf16.mxu0 0
    %1109 = vmatpush1.bf16.msra.mxu0 0
    %1110 = vmatprep.subr.bf16.mxu0 0
    %1111 = vmatpush1.bf16.msra.mxu0 0
    %1112 = vmatprep.subr.bf16.mxu0 0
    %1113 = vmatpush1.bf16.msra.mxu0 0
    %1114 = vmatprep.subr.bf16.mxu0 0
    %1115 = vmatpush1.bf16.msra.mxu0 0
    %1116 = vmatprep.subr.bf16.mxu0 0
    %1117 = vmatpush1.bf16.msra.mxu0 0
    %1118 = vmatprep.mubr.bf16.mxu0 0
    %1119 = vmatmul.mubr.bf16.gmra.mrb[0].mxu0 %v1085
    %v1120 = vpop.f32.mrb[0].mxu0
    %v1121 = vadd.f32 0.0, %v1120
    %v1122 = vpop.f32.mrb[0].mxu0
    %v1123 = vadd.f32 0.0, %v1122
    %v1124 = vpop.f32.mrb[0].mxu0
    %v1125 = vpop.f32.mrb[0].mxu0
    %1126 = vdwg.mxu0
    %1127 = vmatprep.subr.bf16.mxu0 %v209
    %1128 = vmatpush1.bf16.msra.mxu0 %v208
    %1129 = vmatprep.subr.bf16.mxu0 %v213
    %1130 = vmatpush1.bf16.msra.mxu0 %v212
    %1131 = vmatprep.subr.bf16.mxu0 %v217
    %1132 = vmatpush1.bf16.msra.mxu0 %v216
    %1133 = vmatprep.subr.bf16.mxu0 %v221
    %1134 = vmatpush1.bf16.msra.mxu0 %v220
    %1135 = vmatprep.subr.bf16.mxu0 %v225
    %1136 = vmatpush1.bf16.msra.mxu0 %v224
    %1137 = vmatprep.subr.bf16.mxu0 %v229
    %1138 = vmatpush1.bf16.msra.mxu0 %v228
    %1139 = vmatprep.subr.bf16.mxu0 %v233
    %1140 = vmatpush1.bf16.msra.mxu0 %v232
    %1141 = vmatprep.subr.bf16.mxu0 %v237
    %1142 = vmatpush1.bf16.msra.mxu0 %v236
    %1143 = vmatprep.subr.bf16.mxu0 0
    %1144 = vmatpush1.bf16.msra.mxu0 0
    %1145 = vmatprep.subr.bf16.mxu0 0
    %1146 = vmatpush1.bf16.msra.mxu0 0
    %1147 = vmatprep.subr.bf16.mxu0 0
    %1148 = vmatpush1.bf16.msra.mxu0 0
    %1149 = vmatprep.subr.bf16.mxu0 0
    %1150 = vmatpush1.bf16.msra.mxu0 0
    %1151 = vmatprep.subr.bf16.mxu0 0
    %1152 = vmatpush1.bf16.msra.mxu0 0
    %1153 = vmatprep.subr.bf16.mxu0 0
    %1154 = vmatpush1.bf16.msra.mxu0 0
    %1155 = vmatprep.subr.bf16.mxu0 0
    %1156 = vmatpush1.bf16.msra.mxu0 0
    %1157 = vmatprep.subr.bf16.mxu0 0
    %1158 = vmatpush1.bf16.msra.mxu0 0
    %1159 = vmatprep.mubr.bf16.mxu0 0
    %1160 = vmatmul.mubr.bf16.gmra.mrb[0].mxu0 %v1085
    %v1161 = vpop.f32.mrb[0].mxu0
    %v1162 = vadd.f32 0.0, %v1161
    %v1163 = vpop.f32.mrb[0].mxu0
    %v1164 = vadd.f32 0.0, %v1163
    %v1165 = vpop.f32.mrb[0].mxu0
    %v1166 = vpop.f32.mrb[0].mxu0
    %1167 = vdwg.mxu0
    %v1172 = vcombine.low %v1121, %v1123
    %v1173 = vcombine.low %v1162, %v1164
    %v1175 = vunpack.c.l.s4 1966171168
    %v1176 = vunpack.c.0.s8 %v1175
    %v1177 = vlaneseq
    %v1178 = vshrl.u32 %v1177, 7
    %v1179 = vsub.s32 %v1176, %v1178
    %v1180 = vrot.slane %v1172, %v1179
    %v1182 = vunpack.c.l.s4 1966171168
    %v1183 = vunpack.c.0.s8 %v1182
    %v1184 = vlaneseq
    %v1185 = vshrl.u32 %v1184, 7
    %v1186 = vsub.s32 %v1183, %v1185
    %v1187 = vrot.slane %v1173, %v1186
    %v1188 = vcombine.low %v1180, %v1187
    %v1190 = vunpack.c.l.s4 1966171168
    %v1191 = vunpack.c.0.s8 %v1190
    %v1192 = vlaneseq
    %v1193 = vshrl.u32 %v1192, 7
    %v1194 = vsub.s32 %v1191, %v1193
    %v1195 = vrot.slane %v1188, %v1194
    %v1197 = vadd.f32 %v1084, %v1195
    %v1198 = vtanh.pop %v1197
    %v1199 = vmul.f32 %v1198, 0.5
    %v1200 = vadd.f32 %v1199, 0.5
    %v1202 = vrot.slane %v1198, 1
    %v1204 = vmul.f32 %v1202, 0.5
    %v1205 = vadd.f32 %v1204, 0.5
    %v1206 = vrot.slane %v1198, 3
    %v1208 = vmul.f32 %v1206, 0.5
    %v1209 = vadd.f32 %v1208, 0.5
    %v1210 = vmul.f32 %v1205, %v1078
    %v1211 = vrot.slane %v1198, 2
    %v1213 = vmul.f32 %v1200, %v1211
    %v1214 = vadd.f32 %v1210, %v1213
    %v1215 = vtanh.pop %v1214
    %v1216 = vmul.f32 %v1209, %v1215
    %v1217 = vld [vmem:[%s4] sm:$0x1]
    %v1218 = vmul.f32 %v1216, %v1217
    %vm1219 = vcmask 1040384
    %v1220 = vsel %vm1219, %v1218, 0.0
    %1221 = vadd.xlane.f32.xlu0 %v1220
    %v1222 = vpop.xlane.xlu0 %1221
    %v1223 = vld [vmem:[#allocation2] sm:$0x1]
    %v1224 = vadd.f32 %v1222, %v1223
    %vm1225 = vcmask 0
    %1226 = vst.msk [vmem:[#allocation8] sm:$0x1] %vm1225, %v1224
    // Predicated region
    $region34: #{lstm_forward.1} parent=1 // pred_check
      _
    $region35: #{lstm_forward.1} parent=1 // pred_check_branch
      %1228 = sbr.rel (0) target = $region37
    $region36: #{lstm_forward.1} parent=1 // pred_region
      %s1230 = ssub.s32 16, 16
      %1231 = vsyncadd [#allocation5], %s1230
      %s1233 = sshll.u32 [#allocation8], 4
      %s1234 = int_to_ptr.vmem [resolvable:$true] %s1233
      %1236 = dma.vmem_to_hbm [thread:$0]  %s1234, 16, %s6, [#allocation5]
    $region37: #{lstm_forward.1} parent=1 // pred_fallthru
      _
    // Predicated region
    $region38: #{lstm_forward.1} parent=1 // pred_check
      _
    $region39: #{lstm_forward.1} parent=1 // pred_check_branch
      %1238 = sbr.rel (0) target = $region41
    $region40: #{lstm_forward.1} parent=1 // pred_region
      %1239 = dma.done [#allocation5], 16
    $region41: #{lstm_forward.1} parent=1 // pred_fallthru
      _
    %1240 = vsyncpa [#allocation4], 1
    %1241 = vsyncpa [#allocation5], 1
    %1242 = vsyncpa [#allocation6], 1

</llo_original>
